<compile_context>
chip_gen: v7x
topology: tpu7x:2x2x1
jax: 0.10.0
libtpu: 0.0.40
codegen_flags: <defaults>
</compile_context>

<pallas_src>
import jax
import jax.numpy as jnp
from jax.experimental import pallas as pl
from jax.experimental.pallas import tpu as pltpu

EPS = 1e-3  # BatchNorm2d eps


def _conv_pool(xm_ref, xe_ref, wmat_ref):
    """Conv (im2col matmul) + 2x2 max-pool branches for one row tile.

    xm_ref: (1, TH, 2, Wg, 2*Cin)  padded rows grouped in pairs; cols grouped in pairs
    xe_ref: (1, 1, 2, Wg, 2*Cin)   the row-pair just below the tile (boundary row)
    wmat_ref: (9*Cin, Cconv)       (kh, kw, cin) -> cout
    Returns conv (TH*Wo, Cconv) f32 and pool (TH*Wo, Cin) f32.
    """
    xm = xm_ref[0]                    # (TH, 2, Wg, C2)
    xe = xe_ref[0]                    # (1, 2, Wg, C2)
    TH, _, Wg, C2 = xm.shape
    Cin = C2 // 2
    Wo = Wg - 1

    a_even = xm[:, 0]                 # padded rows 2r      (TH, Wg, C2)
    a_odd = xm[:, 1]                  # padded rows 2r+1
    xe0 = xe[:, 0]                    # padded row  2*TH    (1, Wg, C2)
    if TH > 1:
        a_next = jnp.concatenate([a_even[1:], xe0], axis=0)   # padded rows 2r+2
    else:
        a_next = xe0

    def wtap(arr, kw):
        # kw=0 -> padded col 2wo ; kw=1 -> 2wo+1 ; kw=2 -> 2wo+2   (all contiguous)
        if kw == 0:
            return arr[:, 0:Wo, 0:Cin]
        if kw == 1:
            return arr[:, 0:Wo, Cin:C2]
        return arr[:, 1:Wg, 0:Cin]

    rows = (a_even, a_odd, a_next)    # kh = 0, 1, 2
    taps = [wtap(rows[kh], kw) for kh in range(3) for kw in range(3)]
    patches = jnp.concatenate(taps, axis=-1).reshape(TH * Wo, 9 * Cin)
    conv = jnp.dot(patches, wmat_ref[...], preferred_element_type=jnp.float32)

    # pool(ho, wo) = max over original rows 2ho, 2ho+1 and cols 2wo, 2wo+1
    #             = padded rows 2ho+1, 2ho+2 and padded cols 2wo+1, 2wo+2.
    pool = jnp.maximum(jnp.maximum(wtap(a_odd, 1), wtap(a_odd, 2)),
                       jnp.maximum(wtap(a_next, 1), wtap(a_next, 2)))
    pool = pool.reshape(TH * Wo, Cin)
    return conv, pool


def _stats_kernel(xm_ref, xe_ref, wmat_ref, stats_ref):
    """Pass 1: per-tile partial BN statistics (sum, sum of squares) per channel."""
    conv, pool = _conv_pool(xm_ref, xe_ref, wmat_ref)
    y = jnp.concatenate([conv, pool], axis=-1)            # (TM, Cout)
    s1 = jnp.sum(y, axis=0, keepdims=True)                # (1, Cout)
    s2 = jnp.sum(y * y, axis=0, keepdims=True)
    stats_ref[...] = jnp.concatenate([s1, s2], axis=0)[None]   # (1, 2, Cout)


def _apply_kernel(xm_ref, xe_ref, wmat_ref, scale_ref, shift_ref, out_ref):
    """Pass 2: recompute branches, apply folded BN (scale/shift) + ReLU, store."""
    conv, pool = _conv_pool(xm_ref, xe_ref, wmat_ref)
    y = jnp.concatenate([conv, pool], axis=-1)            # (TM, Cout)
    y = y * scale_ref[...] + shift_ref[...]
    out_ref[...] = jnp.maximum(y, 0.0)


def _pick_th(Ho, Wo, Cin, Cout, vmem_budget_bytes=4 << 20):
    """Largest divisor TH of Ho whose tile fits a ~4 MiB VMEM working set.

    Rough f32 per-output-pixel footprint: double-buffered input tile (~2*8*Cin),
    im2col patches (9*Cin), pool/extra tap (Cin), double-buffered output +
    conv/pool/y intermediates (~4*Cout).
    """
    per_px = 4 * (16 * Cin + 9 * Cin + Cin + 4 * Cout)
    target_px = max(Wo, vmem_budget_bytes // max(per_px, 1))
    th = max(1, min(Ho, target_px // max(Wo, 1)))
    while Ho % th:
        th -= 1
    return th


def downsampler_block(x_nchw, conv_w, conv_b, bn_gamma, bn_beta):
    """x_nchw: (N, Cin, H, W) f32. conv_w: (Cout-Cin, Cin, 3, 3). Returns NCHW."""
    del conv_b  # cancels exactly under training-mode BatchNorm (mean subtraction)
    N, Cin, H, W = x_nchw.shape
    Cconv = conv_w.shape[0]
    Cout = Cconv + Cin
    assert H % 2 == 0 and W % 2 == 0, "stride-2 block expects even H, W"
    Ho, Wo = H // 2, W // 2
    assert Wo % 8 == 0, "W must be a multiple of 16 for this output tiling"
    M = N * Ho * Wo

    TH = _pick_th(Ho, Wo, Cin, Cout)
    nhb = Ho // TH
    TM = TH * Wo
    G = N * nhb
    Wg = Wo + 1                 # (W + 2) // 2
    C2 = 2 * Cin

    # Layout glue (one fused pass over x in XLA): NCHW -> NHWC, pad by 1, then a
    # pure reshape grouping rows and columns in pairs:
    #   xp5[n, g, p, w, q*Cin + c] = xpad[n, 2g + p, 2w + q, c]
    x = jnp.transpose(x_nchw, (0, 2, 3, 1))
    xp = jnp.pad(x, ((0, 0), (1, 1), (1, 1), (0, 0)))
    xp5 = xp.reshape(N, (H + 2) // 2, 2, Wg, C2)

    # (kh, kw, cin) -> cout, matching the in-kernel patch ordering.
    wmat = jnp.transpose(conv_w, (2, 3, 1, 0)).reshape(9 * Cin, Cconv)

    xm_spec = pl.BlockSpec((1, TH, 2, Wg, C2), lambda n, hb: (n, hb, 0, 0, 0))
    xe_spec = pl.BlockSpec((1, 1, 2, Wg, C2),
                           lambda n, hb: (n, (hb + 1) * TH, 0, 0, 0))
    w_spec = pl.BlockSpec((9 * Cin, Cconv), lambda n, hb: (0, 0))
    cparams = pltpu.CompilerParams(
        dimension_semantics=("parallel", "parallel"))

    # ---- pass 1: partial per-channel statistics per tile ----
    stats = pl.pallas_call(
        _stats_kernel,
        grid=(N, nhb),
        in_specs=[xm_spec, xe_spec, w_spec],
        out_specs=pl.BlockSpec((1, 2, Cout), lambda n, hb: (n * nhb + hb, 0, 0)),
        out_shape=jax.ShapeDtypeStruct((G, 2, Cout), jnp.float32),
        compiler_params=cparams,
    )(xp5, xp5, wmat)

    # ---- tiny cross-tile reduction + gamma/beta folding (XLA) ----
    s1 = jnp.sum(stats[:, 0, :], axis=0)
    s2 = jnp.sum(stats[:, 1, :], axis=0)
    mean = s1 / M
    var = s2 / M - mean * mean                      # biased (training-mode) variance
    scale = bn_gamma * jax.lax.rsqrt(var + EPS)
    shift = bn_beta - mean * scale

    # ---- pass 2: normalize + ReLU, single fused (M, Cout) output ----
    vec_spec = pl.BlockSpec((1, Cout), lambda n, hb: (0, 0))
    out_flat = pl.pallas_call(
        _apply_kernel,
        grid=(N, nhb),
        in_specs=[xm_spec, xe_spec, w_spec, vec_spec, vec_spec],
        out_specs=pl.BlockSpec((TM, Cout), lambda n, hb: (n * nhb + hb, 0)),
        out_shape=jax.ShapeDtypeStruct((M, Cout), jnp.float32),
        compiler_params=cparams,
    )(xp5, xp5, wmat, scale.reshape(1, Cout), shift.reshape(1, Cout))

    out = out_flat.reshape(N, Ho, Wo, Cout)
    return jnp.transpose(out, (0, 3, 1, 2))          # back to NCHW


def _reference(x, w, b, gamma, beta):
    """Pure-JAX replica of the PyTorch forward (training-mode BN)."""
    conv = jax.lax.conv_general_dilated(
        x, w, window_strides=(2, 2), padding=((1, 1), (1, 1)),
        dimension_numbers=('NCHW', 'OIHW', 'NCHW'))
    conv = conv + b.reshape(1, -1, 1, 1)
    pool = jax.lax.reduce_window(x, -jnp.inf, jax.lax.max,
                                 (1, 1, 2, 2), (1, 1, 2, 2), 'VALID')
    cat = jnp.concatenate([conv, pool], axis=1)
    mean = jnp.mean(cat, axis=(0, 2, 3), keepdims=True)
    var = jnp.mean((cat - mean) ** 2, axis=(0, 2, 3), keepdims=True)
    y = (cat - mean) / jnp.sqrt(var + EPS) * gamma.reshape(1, -1, 1, 1) \
        + beta.reshape(1, -1, 1, 1)
    return jnp.maximum(y, 0.0)


if __name__ == "__main__":
    # DownsamplerBlock(ninput=4, noutput=16) at a small size.
    N, Cin, H, W = 2, 4, 16, 16
    noutput = 16
    Cconv = noutput - Cin

    key = jax.random.PRNGKey(0)
    kx, kw, kb, kg, kbeta = jax.random.split(key, 5)
    x = jax.random.normal(kx, (N, Cin, H, W), dtype=jnp.float32)
    conv_w = 0.1 * jax.random.normal(kw, (Cconv, Cin, 3, 3), dtype=jnp.float32)
    conv_b = 0.1 * jax.random.normal(kb, (Cconv,), dtype=jnp.float32)
    bn_gamma = 1.0 + 0.1 * jax.random.normal(kg, (noutput,), dtype=jnp.float32)
    bn_beta = 0.1 * jax.random.normal(kbeta, (noutput,), dtype=jnp.float32)

    fn = jax.jit(downsampler_block)
    out = jax.block_until_ready(fn(x, conv_w, conv_b, bn_gamma, bn_beta))

    ref = jax.block_until_ready(_reference(x, conv_w, conv_b, bn_gamma, bn_beta))
    assert out.shape == (N, noutput, H // 2, W // 2), out.shape
    assert jnp.allclose(out, ref, rtol=1e-4, atol=1e-4), \
        float(jnp.max(jnp.abs(out - ref)))

    print("KERNEL_OK")
</pallas_src>

<mosaic_0001>
module attributes {stable_mosaic.version = 11 : i64} {
  func.func @_stats_kernel(%arg0: i32, %arg1: i32, %arg2: memref<1x8x2x9x8xf32, #tpu.memory_space<vmem>>, %arg3: memref<1x1x2x9x8xf32, #tpu.memory_space<vmem>>, %arg4: memref<36x12xf32, #tpu.memory_space<vmem>>, %arg5: memref<1x2x16xf32, #tpu.memory_space<vmem>>) attributes {dimension_semantics = [#tpu.dimension_semantics<parallel>, #tpu.dimension_semantics<parallel>], iteration_bounds = array<i64: 2, 1>, scalar_prefetch = 0 : i64, scratch_operands = 0 : i64, tpu.core_type = #tpu.core_type<tc>, window_params = [{transform_indices = @transform_0, window_bounds = array<i64: 1, 8, 2, 9, 8>}, {transform_indices = @transform_1, window_bounds = array<i64: 1, 1, 2, 9, 8>}, {pipeline_mode = #tpu.pipeline_mode<synchronous>, transform_indices = @transform_2, window_bounds = array<i64: 36, 12>}, {transform_indices = @transform_3, window_bounds = array<i64: 1, 2, 16>}]} {
    %c0 = arith.constant 0 : index
    %c0_0 = arith.constant 0 : index
    %c0_1 = arith.constant 0 : index
    %c0_2 = arith.constant 0 : index
    %c0_3 = arith.constant 0 : index
    %0 = vector.load %arg2[%c0, %c0_0, %c0_1, %c0_2, %c0_3] : memref<1x8x2x9x8xf32, #tpu.memory_space<vmem>>, vector<1x8x2x9x8xf32>
    %1 = vector.shape_cast %0 : vector<1x8x2x9x8xf32> to vector<8x2x9x8xf32>
    %c0_4 = arith.constant 0 : index
    %c0_5 = arith.constant 0 : index
    %c0_6 = arith.constant 0 : index
    %c0_7 = arith.constant 0 : index
    %c0_8 = arith.constant 0 : index
    %2 = vector.load %arg3[%c0_4, %c0_5, %c0_6, %c0_7, %c0_8] : memref<1x1x2x9x8xf32, #tpu.memory_space<vmem>>, vector<1x1x2x9x8xf32>
    %3 = vector.shape_cast %2 : vector<1x1x2x9x8xf32> to vector<1x2x9x8xf32>
    %4 = vector.extract_strided_slice %1 {offsets = [0, 0, 0, 0], sizes = [8, 1, 9, 8], strides = [1, 1, 1, 1]} : vector<8x2x9x8xf32> to vector<8x1x9x8xf32>
    %5 = vector.shape_cast %4 : vector<8x1x9x8xf32> to vector<8x9x8xf32>
    %6 = vector.extract_strided_slice %1 {offsets = [0, 1, 0, 0], sizes = [8, 1, 9, 8], strides = [1, 1, 1, 1]} : vector<8x2x9x8xf32> to vector<8x1x9x8xf32>
    %7 = vector.shape_cast %6 : vector<8x1x9x8xf32> to vector<8x9x8xf32>
    %8 = vector.extract_strided_slice %3 {offsets = [0, 0, 0, 0], sizes = [1, 1, 9, 8], strides = [1, 1, 1, 1]} : vector<1x2x9x8xf32> to vector<1x1x9x8xf32>
    %9 = vector.shape_cast %8 : vector<1x1x9x8xf32> to vector<1x9x8xf32>
    %10 = vector.extract_strided_slice %5 {offsets = [1, 0, 0], sizes = [7, 9, 8], strides = [1, 1, 1]} : vector<8x9x8xf32> to vector<7x9x8xf32>
    %11 = tpu.concatenate %10, %9 in 0 : vector<7x9x8xf32>, vector<1x9x8xf32> -> vector<8x9x8xf32>
    %12 = vector.extract_strided_slice %5 {offsets = [0, 0, 0], sizes = [8, 8, 4], strides = [1, 1, 1]} : vector<8x9x8xf32> to vector<8x8x4xf32>
    %13 = vector.extract_strided_slice %5 {offsets = [0, 0, 4], sizes = [8, 8, 4], strides = [1, 1, 1]} : vector<8x9x8xf32> to vector<8x8x4xf32>
    %14 = vector.extract_strided_slice %5 {offsets = [0, 1, 0], sizes = [8, 8, 4], strides = [1, 1, 1]} : vector<8x9x8xf32> to vector<8x8x4xf32>
    %15 = vector.extract_strided_slice %7 {offsets = [0, 0, 0], sizes = [8, 8, 4], strides = [1, 1, 1]} : vector<8x9x8xf32> to vector<8x8x4xf32>
    %16 = vector.extract_strided_slice %7 {offsets = [0, 0, 4], sizes = [8, 8, 4], strides = [1, 1, 1]} : vector<8x9x8xf32> to vector<8x8x4xf32>
    %17 = vector.extract_strided_slice %7 {offsets = [0, 1, 0], sizes = [8, 8, 4], strides = [1, 1, 1]} : vector<8x9x8xf32> to vector<8x8x4xf32>
    %18 = vector.extract_strided_slice %11 {offsets = [0, 0, 0], sizes = [8, 8, 4], strides = [1, 1, 1]} : vector<8x9x8xf32> to vector<8x8x4xf32>
    %19 = vector.extract_strided_slice %11 {offsets = [0, 0, 4], sizes = [8, 8, 4], strides = [1, 1, 1]} : vector<8x9x8xf32> to vector<8x8x4xf32>
    %20 = vector.extract_strided_slice %11 {offsets = [0, 1, 0], sizes = [8, 8, 4], strides = [1, 1, 1]} : vector<8x9x8xf32> to vector<8x8x4xf32>
    %21 = tpu.concatenate %12, %13, %14, %15, %16, %17, %18, %19, %20 in 2 : vector<8x8x4xf32>, vector<8x8x4xf32>, vector<8x8x4xf32>, vector<8x8x4xf32>, vector<8x8x4xf32>, vector<8x8x4xf32>, vector<8x8x4xf32>, vector<8x8x4xf32>, vector<8x8x4xf32> -> vector<8x8x36xf32>
    %22 = vector.shape_cast %21 : vector<8x8x36xf32> to vector<64x36xf32>
    %c0_9 = arith.constant 0 : index
    %c0_10 = arith.constant 0 : index
    %23 = vector.load %arg4[%c0_9, %c0_10] : memref<36x12xf32, #tpu.memory_space<vmem>>, vector<36x12xf32>
    %cst = arith.constant dense<0.000000e+00> : vector<64x12xf32>
    %24 = tpu.matmul %22, %23, %cst {dimension_numbers = #tpu.dot_dimension_numbers<[1], [0], [0], [1], [0, 0, 1, 1], [], []>} : vector<64x36xf32>, vector<36x12xf32>, vector<64x12xf32> -> vector<64x12xf32>
    %25 = vector.extract_strided_slice %7 {offsets = [0, 0, 4], sizes = [8, 8, 4], strides = [1, 1, 1]} : vector<8x9x8xf32> to vector<8x8x4xf32>
    %26 = vector.extract_strided_slice %7 {offsets = [0, 1, 0], sizes = [8, 8, 4], strides = [1, 1, 1]} : vector<8x9x8xf32> to vector<8x8x4xf32>
    %27 = arith.maximumf %25, %26 : vector<8x8x4xf32>
    %28 = vector.extract_strided_slice %11 {offsets = [0, 0, 4], sizes = [8, 8, 4], strides = [1, 1, 1]} : vector<8x9x8xf32> to vector<8x8x4xf32>
    %29 = vector.extract_strided_slice %11 {offsets = [0, 1, 0], sizes = [8, 8, 4], strides = [1, 1, 1]} : vector<8x9x8xf32> to vector<8x8x4xf32>
    %30 = arith.maximumf %28, %29 : vector<8x8x4xf32>
    %31 = arith.maximumf %27, %30 : vector<8x8x4xf32>
    %32 = vector.shape_cast %31 : vector<8x8x4xf32> to vector<64x4xf32>
    %33 = tpu.concatenate %24, %32 in 1 : vector<64x12xf32>, vector<64x4xf32> -> vector<64x16xf32>
    %cst_11 = arith.constant dense<0.000000e+00> : vector<16xf32>
    %34 = vector.multi_reduction <add>, %33, %cst_11 [0] : vector<64x16xf32> to vector<16xf32>
    %35 = vector.shape_cast %34 : vector<16xf32> to vector<1x16xf32>
    %36 = arith.mulf %33, %33 : vector<64x16xf32>
    %cst_12 = arith.constant dense<0.000000e+00> : vector<16xf32>
    %37 = vector.multi_reduction <add>, %36, %cst_12 [0] : vector<64x16xf32> to vector<16xf32>
    %38 = vector.shape_cast %37 : vector<16xf32> to vector<1x16xf32>
    %39 = tpu.concatenate %35, %38 in 0 : vector<1x16xf32>, vector<1x16xf32> -> vector<2x16xf32>
    %40 = vector.shape_cast %39 : vector<2x16xf32> to vector<1x2x16xf32>
    %c0_13 = arith.constant 0 : index
    %c0_14 = arith.constant 0 : index
    %c0_15 = arith.constant 0 : index
    %41 = vector.load %arg5[%c0_13, %c0_14, %c0_15] : memref<1x2x16xf32, #tpu.memory_space<vmem>>, vector<1x2x16xf32>
    tpu.vector_store %arg5[%c0_13, %c0_14, %c0_15], %40 {strides = array<i32>} : memref<1x2x16xf32, #tpu.memory_space<vmem>>, vector<1x2x16xf32>,
    return
  }
  func.func @transform_0(%arg0: i32, %arg1: i32) -> (i32, i32, i32, i32, i32) {
    %c0_i32 = arith.constant 0 : i32
    %c0_i32_0 = arith.constant 0 : i32
    %c0_i32_1 = arith.constant 0 : i32
    %c0_i32_2 = arith.constant 0 : i32
    return %arg0, %arg1, %c0_i32, %c0_i32_0, %c0_i32_1 : i32, i32, i32, i32, i32
  }
  func.func @transform_1(%arg0: i32, %arg1: i32) -> (i32, i32, i32, i32, i32) {
    %c1_i32 = arith.constant 1 : i32
    %0 = arith.addi %arg1, %c1_i32 : i32
    %c8_i32 = arith.constant 8 : i32
    %1 = arith.muli %0, %c8_i32 : i32
    %c0_i32 = arith.constant 0 : i32
    %c0_i32_0 = arith.constant 0 : i32
    %c0_i32_1 = arith.constant 0 : i32
    %c0_i32_2 = arith.constant 0 : i32
    return %arg0, %1, %c0_i32, %c0_i32_0, %c0_i32_1 : i32, i32, i32, i32, i32
  }
  func.func @transform_2(%arg0: i32, %arg1: i32) -> (i32, i32) {
    %c0_i32 = arith.constant 0 : i32
    %c0_i32_0 = arith.constant 0 : i32
    %c0_i32_1 = arith.constant 0 : i32
    return %c0_i32, %c0_i32_0 : i32, i32
  }
  func.func @transform_3(%arg0: i32, %arg1: i32) -> (i32, i32, i32) {
    %c1_i32 = arith.constant 1 : i32
    %0 = arith.muli %arg0, %c1_i32 : i32
    %1 = arith.addi %0, %arg1 : i32
    %c0_i32 = arith.constant 0 : i32
    %c0_i32_0 = arith.constant 0 : i32
    %c0_i32_1 = arith.constant 0 : i32
    return %1, %c0_i32, %c0_i32_0 : i32, i32, i32
  }
}

module attributes {stable_mosaic.version = 11 : i64} {
  func.func @_apply_kernel(%arg0: i32, %arg1: i32, %arg2: memref<1x8x2x9x8xf32, #tpu.memory_space<vmem>>, %arg3: memref<1x1x2x9x8xf32, #tpu.memory_space<vmem>>, %arg4: memref<36x12xf32, #tpu.memory_space<vmem>>, %arg5: memref<1x16xf32, #tpu.memory_space<vmem>>, %arg6: memref<1x16xf32, #tpu.memory_space<vmem>>, %arg7: memref<64x16xf32, #tpu.memory_space<vmem>>) attributes {dimension_semantics = [#tpu.dimension_semantics<parallel>, #tpu.dimension_semantics<parallel>], iteration_bounds = array<i64: 2, 1>, scalar_prefetch = 0 : i64, scratch_operands = 0 : i64, tpu.core_type = #tpu.core_type<tc>, window_params = [{transform_indices = @transform_0, window_bounds = array<i64: 1, 8, 2, 9, 8>}, {transform_indices = @transform_1, window_bounds = array<i64: 1, 1, 2, 9, 8>}, {pipeline_mode = #tpu.pipeline_mode<synchronous>, transform_indices = @transform_2, window_bounds = array<i64: 36, 12>}, {pipeline_mode = #tpu.pipeline_mode<synchronous>, transform_indices = @transform_3, window_bounds = array<i64: 1, 16>}, {pipeline_mode = #tpu.pipeline_mode<synchronous>, transform_indices = @transform_4, window_bounds = array<i64: 1, 16>}, {transform_indices = @transform_5, window_bounds = array<i64: 64, 16>}]} {
    %c0 = arith.constant 0 : index
    %c0_0 = arith.constant 0 : index
    %c0_1 = arith.constant 0 : index
    %c0_2 = arith.constant 0 : index
    %c0_3 = arith.constant 0 : index
    %0 = vector.load %arg2[%c0, %c0_0, %c0_1, %c0_2, %c0_3] : memref<1x8x2x9x8xf32, #tpu.memory_space<vmem>>, vector<1x8x2x9x8xf32>
    %1 = vector.shape_cast %0 : vector<1x8x2x9x8xf32> to vector<8x2x9x8xf32>
    %c0_4 = arith.constant 0 : index
    %c0_5 = arith.constant 0 : index
    %c0_6 = arith.constant 0 : index
    %c0_7 = arith.constant 0 : index
    %c0_8 = arith.constant 0 : index
    %2 = vector.load %arg3[%c0_4, %c0_5, %c0_6, %c0_7, %c0_8] : memref<1x1x2x9x8xf32, #tpu.memory_space<vmem>>, vector<1x1x2x9x8xf32>
    %3 = vector.shape_cast %2 : vector<1x1x2x9x8xf32> to vector<1x2x9x8xf32>
    %4 = vector.extract_strided_slice %1 {offsets = [0, 0, 0, 0], sizes = [8, 1, 9, 8], strides = [1, 1, 1, 1]} : vector<8x2x9x8xf32> to vector<8x1x9x8xf32>
    %5 = vector.shape_cast %4 : vector<8x1x9x8xf32> to vector<8x9x8xf32>
    %6 = vector.extract_strided_slice %1 {offsets = [0, 1, 0, 0], sizes = [8, 1, 9, 8], strides = [1, 1, 1, 1]} : vector<8x2x9x8xf32> to vector<8x1x9x8xf32>
    %7 = vector.shape_cast %6 : vector<8x1x9x8xf32> to vector<8x9x8xf32>
    %8 = vector.extract_strided_slice %3 {offsets = [0, 0, 0, 0], sizes = [1, 1, 9, 8], strides = [1, 1, 1, 1]} : vector<1x2x9x8xf32> to vector<1x1x9x8xf32>
    %9 = vector.shape_cast %8 : vector<1x1x9x8xf32> to vector<1x9x8xf32>
    %10 = vector.extract_strided_slice %5 {offsets = [1, 0, 0], sizes = [7, 9, 8], strides = [1, 1, 1]} : vector<8x9x8xf32> to vector<7x9x8xf32>
    %11 = tpu.concatenate %10, %9 in 0 : vector<7x9x8xf32>, vector<1x9x8xf32> -> vector<8x9x8xf32>
    %12 = vector.extract_strided_slice %5 {offsets = [0, 0, 0], sizes = [8, 8, 4], strides = [1, 1, 1]} : vector<8x9x8xf32> to vector<8x8x4xf32>
    %13 = vector.extract_strided_slice %5 {offsets = [0, 0, 4], sizes = [8, 8, 4], strides = [1, 1, 1]} : vector<8x9x8xf32> to vector<8x8x4xf32>
    %14 = vector.extract_strided_slice %5 {offsets = [0, 1, 0], sizes = [8, 8, 4], strides = [1, 1, 1]} : vector<8x9x8xf32> to vector<8x8x4xf32>
    %15 = vector.extract_strided_slice %7 {offsets = [0, 0, 0], sizes = [8, 8, 4], strides = [1, 1, 1]} : vector<8x9x8xf32> to vector<8x8x4xf32>
    %16 = vector.extract_strided_slice %7 {offsets = [0, 0, 4], sizes = [8, 8, 4], strides = [1, 1, 1]} : vector<8x9x8xf32> to vector<8x8x4xf32>
    %17 = vector.extract_strided_slice %7 {offsets = [0, 1, 0], sizes = [8, 8, 4], strides = [1, 1, 1]} : vector<8x9x8xf32> to vector<8x8x4xf32>
    %18 = vector.extract_strided_slice %11 {offsets = [0, 0, 0], sizes = [8, 8, 4], strides = [1, 1, 1]} : vector<8x9x8xf32> to vector<8x8x4xf32>
    %19 = vector.extract_strided_slice %11 {offsets = [0, 0, 4], sizes = [8, 8, 4], strides = [1, 1, 1]} : vector<8x9x8xf32> to vector<8x8x4xf32>
    %20 = vector.extract_strided_slice %11 {offsets = [0, 1, 0], sizes = [8, 8, 4], strides = [1, 1, 1]} : vector<8x9x8xf32> to vector<8x8x4xf32>
    %21 = tpu.concatenate %12, %13, %14, %15, %16, %17, %18, %19, %20 in 2 : vector<8x8x4xf32>, vector<8x8x4xf32>, vector<8x8x4xf32>, vector<8x8x4xf32>, vector<8x8x4xf32>, vector<8x8x4xf32>, vector<8x8x4xf32>, vector<8x8x4xf32>, vector<8x8x4xf32> -> vector<8x8x36xf32>
    %22 = vector.shape_cast %21 : vector<8x8x36xf32> to vector<64x36xf32>
    %c0_9 = arith.constant 0 : index
    %c0_10 = arith.constant 0 : index
    %23 = vector.load %arg4[%c0_9, %c0_10] : memref<36x12xf32, #tpu.memory_space<vmem>>, vector<36x12xf32>
    %cst = arith.constant dense<0.000000e+00> : vector<64x12xf32>
    %24 = tpu.matmul %22, %23, %cst {dimension_numbers = #tpu.dot_dimension_numbers<[1], [0], [0], [1], [0, 0, 1, 1], [], []>} : vector<64x36xf32>, vector<36x12xf32>, vector<64x12xf32> -> vector<64x12xf32>
    %25 = vector.extract_strided_slice %7 {offsets = [0, 0, 4], sizes = [8, 8, 4], strides = [1, 1, 1]} : vector<8x9x8xf32> to vector<8x8x4xf32>
    %26 = vector.extract_strided_slice %7 {offsets = [0, 1, 0], sizes = [8, 8, 4], strides = [1, 1, 1]} : vector<8x9x8xf32> to vector<8x8x4xf32>
    %27 = arith.maximumf %25, %26 : vector<8x8x4xf32>
    %28 = vector.extract_strided_slice %11 {offsets = [0, 0, 4], sizes = [8, 8, 4], strides = [1, 1, 1]} : vector<8x9x8xf32> to vector<8x8x4xf32>
    %29 = vector.extract_strided_slice %11 {offsets = [0, 1, 0], sizes = [8, 8, 4], strides = [1, 1, 1]} : vector<8x9x8xf32> to vector<8x8x4xf32>
    %30 = arith.maximumf %28, %29 : vector<8x8x4xf32>
    %31 = arith.maximumf %27, %30 : vector<8x8x4xf32>
    %32 = vector.shape_cast %31 : vector<8x8x4xf32> to vector<64x4xf32>
    %33 = tpu.concatenate %24, %32 in 1 : vector<64x12xf32>, vector<64x4xf32> -> vector<64x16xf32>
    %c0_11 = arith.constant 0 : index
    %c0_12 = arith.constant 0 : index
    %34 = vector.load %arg5[%c0_11, %c0_12] : memref<1x16xf32, #tpu.memory_space<vmem>>, vector<1x16xf32>
    %35 = vector.broadcast %34 : vector<1x16xf32> to vector<64x16xf32>
    %36 = arith.mulf %33, %35 : vector<64x16xf32>
    %c0_13 = arith.constant 0 : index
    %c0_14 = arith.constant 0 : index
    %37 = vector.load %arg6[%c0_13, %c0_14] : memref<1x16xf32, #tpu.memory_space<vmem>>, vector<1x16xf32>
    %38 = vector.broadcast %37 : vector<1x16xf32> to vector<64x16xf32>
    %39 = arith.addf %36, %38 : vector<64x16xf32>
    %cst_15 = arith.constant 0.000000e+00 : f32
    %40 = vector.broadcast %cst_15 : f32 to vector<64x16xf32>
    %41 = arith.maximumf %39, %40 : vector<64x16xf32>
    %c0_16 = arith.constant 0 : index
    %c0_17 = arith.constant 0 : index
    %42 = vector.load %arg7[%c0_16, %c0_17] : memref<64x16xf32, #tpu.memory_space<vmem>>, vector<64x16xf32>
    tpu.vector_store %arg7[%c0_16, %c0_17], %41 {strides = array<i32>} : memref<64x16xf32, #tpu.memory_space<vmem>>, vector<64x16xf32>,
    return
  }
  func.func @transform_0(%arg0: i32, %arg1: i32) -> (i32, i32, i32, i32, i32) {
    %c0_i32 = arith.constant 0 : i32
    %c0_i32_0 = arith.constant 0 : i32
    %c0_i32_1 = arith.constant 0 : i32
    %c0_i32_2 = arith.constant 0 : i32
    return %arg0, %arg1, %c0_i32, %c0_i32_0, %c0_i32_1 : i32, i32, i32, i32, i32
  }
  func.func @transform_1(%arg0: i32, %arg1: i32) -> (i32, i32, i32, i32, i32) {
    %c1_i32 = arith.constant 1 : i32
    %0 = arith.addi %arg1, %c1_i32 : i32
    %c8_i32 = arith.constant 8 : i32
    %1 = arith.muli %0, %c8_i32 : i32
    %c0_i32 = arith.constant 0 : i32
    %c0_i32_0 = arith.constant 0 : i32
    %c0_i32_1 = arith.constant 0 : i32
    %c0_i32_2 = arith.constant 0 : i32
    return %arg0, %1, %c0_i32, %c0_i32_0, %c0_i32_1 : i32, i32, i32, i32, i32
  }
  func.func @transform_2(%arg0: i32, %arg1: i32) -> (i32, i32) {
    %c0_i32 = arith.constant 0 : i32
    %c0_i32_0 = arith.constant 0 : i32
    %c0_i32_1 = arith.constant 0 : i32
    return %c0_i32, %c0_i32_0 : i32, i32
  }
  func.func @transform_3(%arg0: i32, %arg1: i32) -> (i32, i32) {
    %c0_i32 = arith.constant 0 : i32
    %c0_i32_0 = arith.constant 0 : i32
    %c0_i32_1 = arith.constant 0 : i32
    return %c0_i32, %c0_i32_0 : i32, i32
  }
  func.func @transform_4(%arg0: i32, %arg1: i32) -> (i32, i32) {
    %c0_i32 = arith.constant 0 : i32
    %c0_i32_0 = arith.constant 0 : i32
    %c0_i32_1 = arith.constant 0 : i32
    return %c0_i32, %c0_i32_0 : i32, i32
  }
  func.func @transform_5(%arg0: i32, %arg1: i32) -> (i32, i32) {
    %c1_i32 = arith.constant 1 : i32
    %0 = arith.muli %arg0, %c1_i32 : i32
    %1 = arith.addi %0, %arg1 : i32
    %c0_i32 = arith.constant 0 : i32
    %c0_i32_0 = arith.constant 0 : i32
    return %1, %c0_i32 : i32, i32
  }
}

</mosaic_0001>

<llo_original>
// kernel: downsampler_block.2
$region0: #{downsampler_block.2}
  #allocation0 [shape = 'u32[]', space=smem, size = 0x4, offset = 0x4, fixed_abs, tag = 'smem constant byte address 0x4 - core index']
  #allocation1 [shape = 'u32[144,128]{1,0:T(1,128)}', space=vmem, size = 0x12000, scoped, tag = 'internal scratch']
  %s0 = inlined_call_operand.vmem [shape: f32[2,9,2,9,8], index: 0, kind: input, shape index: {}, may-alias: {0,1}]
  %s1 = inlined_call_operand.vmem [shape: f32[2,9,2,9,8], index: 1, kind: input, shape index: {}, may-alias: {0,1}]
  %s2 = inlined_call_operand.vmem [shape: f32[36,12], index: 2, kind: input, shape index: {}]
  %s3 = inlined_call_operand.vmem [shape: f32[2,2,16], index: 3, kind: output, shape index: {}]
  %s4 = sld [smem:[#allocation0]]
  $region45: #{downsampler_block.2} parent=0
    _
  %s6 = ssub.s32 1, %s4
  %s7 = scalar_select 0, %s6, %s4
  loop: start=0, step=1, limit=4
  $region2: #{downsampler_block.2} parent=0 // loop_pre_header
    _
  $region3: #{downsampler_block.2} parent=0 // loop_header
    %s9 = sphi 0, %s13
    %p10 = scmp.ge.s32.totalorder %s9, 4
    %s16 = sphi 0, %s28
    %s17 = sphi 0, %s24
    %s18 = sphi 0, %s16
    %s19 = sphi 0, %s17
    %s20 = sphi 0, %s18
    %s21 = sphi 0, %s19
    %s33 = sphi 0, %s35
    %s36 = sphi 0, %s33
    %s37 = sphi 0, %s36
    %s53 = sphi 0, %s37
    %s65 = sphi 0, %s67
    %s68 = sphi 0, %s65
    %s69 = sphi 0, %s68
    %s85 = sphi 0, %s69
    %s89 = sphi 0, %s89
    %s91 = sphi 0, %s89
    %s92 = sphi 0, %s91
    %s106 = sphi 0, %s92
    %s114 = sphi 0, %s116
    %s117 = sphi 0, %s114
    %s118 = sphi 0, %s117
    %s134 = sphi 0, %s118
  $region4: #{downsampler_block.2} parent=0 // loop_header_branch
    %12 = sbr.rel (%p10) target = $region8
  $region5: #{downsampler_block.2} parent=0 // loop_body
    %s14 = ssub.s32 %s9, 1
    %s15 = ssub.s32 %s9, 2
    %s22 = sadd.s32 1, %s17
    %p23 = scmp.ge.s32.totalorder %s22, 1
    %s24 = scalar_select %p23, 0, %s22
    %s25 = sadd.s32 1, %s16
    %s26 = scalar_select %p23, %s25, %s16
    %p27 = scmp.ge.s32.totalorder %s26, 2
    %s28 = scalar_select %p27, 0, %s26
    %s29 = ssub.s32 %s16, %s28
    %s30 = ssub.s32 %s17, %s24
    %s31 = sor.u32 %s29, %s30
    %p32 = scmp.eq.s32.totalorder %s31, 0
    %s34 = sadd.s32 %s33, 1
    %s35 = scalar_select %p32, %s33, %s34
    %p38 = pneg %p32
    %p39 = scmp.eq.s32.totalorder %s9, 1
    %p40 = por %p38, %p39
    %p41 = scmp.ne.s32.totalorder %s33, %s36
    %p42 = scmp.eq.s32.totalorder %s9, 0
    %p43 = por %p41, %p42
    %p44 = scmp.ne.s32.totalorder %s33, %s36
    %p45 = scmp.eq.s32.totalorder %s14, 1
    %p46 = por %p44, %p45
    %p47 = scmp.ne.s32.totalorder %s36, %s37
    %p48 = scmp.eq.s32.totalorder %s14, 0
    %p49 = por %p47, %p48
    %p50 = scmp.ne.s32.totalorder %s36, %s37
    %p51 = scmp.eq.s32.totalorder %s15, 1
    %p52 = por %p50, %p51
    %p54 = scmp.ne.s32.totalorder %s37, %s53
    %p55 = scmp.eq.s32.totalorder %s15, 0
    %p56 = por %p54, %p55
    %s57 = sadd.s32 %s17, 1
    %s58 = smul.u32 %s57, 8
    %s59 = sadd.s32 %s24, 1
    %s60 = smul.u32 %s59, 8
    %s61 = ssub.s32 %s16, %s28
    %s62 = ssub.s32 %s58, %s60
    %s63 = sor.u32 %s61, %s62
    %p64 = scmp.eq.s32.totalorder %s63, 0
    %s66 = sadd.s32 %s65, 1
    %s67 = scalar_select %p64, %s65, %s66
    %p70 = pneg %p64
    %p71 = scmp.eq.s32.totalorder %s9, 1
    %p72 = por %p70, %p71
    %p73 = scmp.ne.s32.totalorder %s65, %s68
    %p74 = scmp.eq.s32.totalorder %s9, 0
    %p75 = por %p73, %p74
    %p76 = scmp.ne.s32.totalorder %s65, %s68
    %p77 = scmp.eq.s32.totalorder %s14, 1
    %p78 = por %p76, %p77
    %p79 = scmp.ne.s32.totalorder %s68, %s69
    %p80 = scmp.eq.s32.totalorder %s14, 0
    %p81 = por %p79, %p80
    %p82 = scmp.ne.s32.totalorder %s68, %s69
    %p83 = scmp.eq.s32.totalorder %s15, 1
    %p84 = por %p82, %p83
    %p86 = scmp.ne.s32.totalorder %s69, %s85
    %p87 = scmp.eq.s32.totalorder %s15, 0
    %p88 = por %p86, %p87
    %s90 = sadd.s32 %s89, 1
    %p93 = scmp.eq.s32.totalorder %s9, 1
    %p94 = scmp.ne.s32.totalorder %s89, %s91
    %p95 = scmp.eq.s32.totalorder %s9, 0
    %p96 = por %p94, %p95
    %p97 = scmp.ne.s32.totalorder %s89, %s91
    %p98 = scmp.eq.s32.totalorder %s14, 1
    %p99 = por %p97, %p98
    %p100 = scmp.ne.s32.totalorder %s91, %s92
    %p101 = scmp.eq.s32.totalorder %s14, 0
    %p102 = por %p100, %p101
    %p103 = scmp.ne.s32.totalorder %s91, %s92
    %p104 = scmp.eq.s32.totalorder %s15, 1
    %p105 = por %p103, %p104
    %p107 = scmp.ne.s32.totalorder %s92, %s106
    %p108 = scmp.eq.s32.totalorder %s15, 0
    %p109 = por %p107, %p108
    %s110 = sadd.s32 %s16, %s17
    %s111 = sadd.s32 %s28, %s24
    %s112 = ssub.s32 %s110, %s111
    %p113 = scmp.eq.s32.totalorder %s112, 0
    %s115 = sadd.s32 %s114, 1
    %s116 = scalar_select %p113, %s114, %s115
    %p119 = pneg %p113
    %p120 = scmp.eq.s32.totalorder %s9, 1
    %p121 = por %p119, %p120
    %p122 = scmp.ne.s32.totalorder %s114, %s117
    %p123 = scmp.eq.s32.totalorder %s9, 0
    %p124 = por %p122, %p123
    %p125 = scmp.ne.s32.totalorder %s114, %s117
    %p126 = scmp.eq.s32.totalorder %s14, 1
    %p127 = por %p125, %p126
    %p128 = scmp.ne.s32.totalorder %s117, %s118
    %p129 = scmp.eq.s32.totalorder %s14, 0
    %p130 = por %p128, %p129
    %p131 = scmp.ne.s32.totalorder %s117, %s118
    %p132 = scmp.eq.s32.totalorder %s15, 1
    %p133 = por %p131, %p132
    %p135 = scmp.ne.s32.totalorder %s118, %s134
    %p136 = scmp.eq.s32.totalorder %s15, 0
    %p137 = por %p135, %p136
    %p138 = scmp.le.s32.totalorder 1, %s9
    %p139 = scmp.lt.s32.totalorder %s9, 3
    %p140 = pnand %p138, %p139
    %p141 = pneg %p140
    // Predicated region
    $region9: #{downsampler_block.2} parent=5 // pred_check
      _
    $region10: #{downsampler_block.2} parent=5 // pred_check_branch
      %143 = sbr.rel (%p140) target = $region12
    $region11: #{downsampler_block.2} parent=5 // pred_region
      %s144 = ssub.s32 %s9, 1
      // Predicated region
      $region13: #{downsampler_block.2} parent=11 // pred_check
        %p145 = pneg %p102
      $region14: #{downsampler_block.2} parent=11 // pred_check_branch
        %147 = sbr.rel (%p145) target = $region16
      $region15: #{downsampler_block.2} parent=11 // pred_region
        _
      $region16: #{downsampler_block.2} parent=11 // pred_fallthru
        _
    $region12: #{downsampler_block.2} parent=5 // pred_fallthru
      _
    %p148 = scmp.lt.s32.totalorder %s9, 2
    // Predicated region
    $region17: #{downsampler_block.2} parent=5 // pred_check
      %p149 = pneg %p148
    $region18: #{downsampler_block.2} parent=5 // pred_check_branch
      %151 = sbr.rel (%p149) target = $region20
    $region19: #{downsampler_block.2} parent=5 // pred_region
      // Predicated region
      $region21: #{downsampler_block.2} parent=19 // pred_check
        %p152 = pneg %p43
      $region22: #{downsampler_block.2} parent=19 // pred_check_branch
        %154 = sbr.rel (%p152) target = $region24
      $region23: #{downsampler_block.2} parent=19 // pred_region
        %s155 = smul.u32 8, %s17
        %s156 = ssub.s32 9, %s155
        %p157 = scmp.lt.s32.totalorder %s156, 8
        %s158 = scalar_select %p157, %s156, 8
        %s159 = smul.u32 128, %s158
        %s160 = smul.u32 %s159, 2
        %s161 = smul.u32 %s160, 2
        %p162 = scmp.lt.s32.totalorder %s16, 1
        %s163 = scalar_select %p162, %s16, 1
        %p164 = scmp.lt.s32.totalorder %s155, 8
        %s165 = scalar_select %p164, %s155, 8
        %s166 = smul.addr %s165, 4
        %s167 = smul.addr %s163, 36
        %s168 = sadd.s32 %s166, %s167
        %s169 = smul.addr %s168, 8
        %s170 = scalar_lea.vmem %s0, %s169
        %s171 = smul.u32 8, %s17
        %s172 = ssub.s32 9, %s171
        %p173 = scmp.lt.s32.totalorder %s172, 8
        %s174 = scalar_select %p173, %s172, 8
        %s175 = smul.u32 128, %s174
        %s176 = smul.u32 %s175, 2
        %s177 = smul.u32 %s176, 2
      $region24: #{downsampler_block.2} parent=19 // pred_fallthru
        _
      // Predicated region
      $region25: #{downsampler_block.2} parent=19 // pred_check
        %p178 = pneg %p75
      $region26: #{downsampler_block.2} parent=19 // pred_check_branch
        %180 = sbr.rel (%p178) target = $region28
      $region27: #{downsampler_block.2} parent=19 // pred_region
        %s181 = sadd.s32 %s17, 1
        %s182 = smul.u32 %s181, 8
        %p183 = scmp.lt.s32.totalorder %s16, 1
        %s184 = scalar_select %p183, %s16, 1
        %p185 = scmp.lt.s32.totalorder %s182, 8
        %s186 = scalar_select %p185, %s182, 8
        %s187 = smul.addr %s186, 4
        %s188 = smul.addr %s184, 36
        %s189 = sadd.s32 %s187, %s188
        %s190 = smul.addr %s189, 8
        %s191 = scalar_lea.vmem %s1, %s190
        %s192 = sadd.s32 %s17, 1
        %s193 = smul.u32 %s192, 8
      $region28: #{downsampler_block.2} parent=19 // pred_fallthru
        _
    $region20: #{downsampler_block.2} parent=5 // pred_fallthru
      _
    %p194 = scmp.le.s32.totalorder 1, %s9
    %p195 = scmp.lt.s32.totalorder %s9, 3
    %p196 = pnand %p194, %p195
    %p197 = pneg %p196
    // Predicated region
    $region29: #{downsampler_block.2} parent=5 // pred_check
      _
    $region30: #{downsampler_block.2} parent=5 // pred_check_branch
      %199 = sbr.rel (%p196) target = $region32
    $region31: #{downsampler_block.2} parent=5 // pred_region
      %s200 = ssub.s32 %s9, 1
      %s201 = smul.u32 8, %s19
      %s202 = ssub.s32 9, %s201
      %p203 = scmp.lt.s32.totalorder %s202, 8
      %s204 = scalar_select %p203, %s202, 8
      %s205 = smul.u32 128, %s204
      %s206 = smul.u32 %s205, 2
      %s207 = smul.u32 %s206, 2
      %p208 = scmp.lt.s32.totalorder %s18, 1
      %s209 = scalar_select %p208, %s18, 1
      %p210 = scmp.lt.s32.totalorder %s201, 8
      %s211 = scalar_select %p210, %s201, 8
      %s212 = smul.addr %s211, 4
      %s213 = smul.addr %s209, 36
      %s214 = sadd.s32 %s212, %s213
      %s215 = smul.addr %s214, 8
      %s216 = scalar_lea.vmem %s0, %s215
      %p217 = pneg %p49
      %p218 = pneg %p46
      %s219 = sadd.s32 %s19, 1
      %s220 = smul.u32 %s219, 8
      %p221 = scmp.lt.s32.totalorder %s18, 1
      %s222 = scalar_select %p221, %s18, 1
      %p223 = scmp.lt.s32.totalorder %s220, 8
      %s224 = scalar_select %p223, %s220, 8
      %s225 = smul.addr %s224, 4
      %s226 = smul.addr %s222, 36
      %s227 = sadd.s32 %s225, %s226
      %s228 = smul.addr %s227, 8
      %s229 = scalar_lea.vmem %s1, %s228
      %p230 = pneg %p81
      %p231 = pneg %p78
      %p232 = pneg %p102
      %p233 = pneg %p99
      %p234 = pneg %p130
      %p235 = pneg %p127
      %s236 = sadd.s32 %s18, %s19
      %p237 = scmp.lt.s32.totalorder %s236, 1
      %s238 = scalar_select %p237, %s236, 1
      %s239 = smul.addr %s238, 2
      %s240 = scalar_lea.vmem %s3, %s239
      %s241 = smul.u32 8, %s19
      %s242 = ssub.s32 9, %s241
      %p243 = scmp.lt.s32.totalorder %s242, 8
      %s244 = scalar_select %p243, %s242, 8
      %s245 = smul.u32 128, %s244
      %s246 = smul.u32 %s245, 2
      %s247 = smul.u32 %s246, 2
      %p248 = scmp.lt.s32.totalorder %s18, 1
      %s249 = scalar_select %p248, %s18, 1
      %p250 = scmp.lt.s32.totalorder %s241, 8
      %s251 = scalar_select %p250, %s241, 8
      %s252 = smul.addr %s251, 4
      %s253 = smul.addr %s249, 36
      %s254 = sadd.s32 %s252, %s253
      %s255 = smul.addr %s254, 8
      %s256 = scalar_lea.vmem %s0, %s255
      %s257 = smul.u32 8, %s19
      %s258 = ssub.s32 9, %s257
      %p259 = scmp.lt.s32.totalorder %s258, 8
      %s260 = scalar_select %p259, %s258, 8
      %s261 = smul.u32 128, %s260
      %s262 = smul.u32 %s261, 2
      %s263 = smul.u32 %s262, 2
      %s264 = sadd.s32 %s19, 1
      %s265 = smul.u32 %s264, 8
      %p266 = scmp.lt.s32.totalorder %s18, 1
      %s267 = scalar_select %p266, %s18, 1
      %p268 = scmp.lt.s32.totalorder %s265, 8
      %s269 = scalar_select %p268, %s265, 8
      %s270 = smul.addr %s269, 4
      %s271 = smul.addr %s267, 36
      %s272 = sadd.s32 %s270, %s271
      %s273 = smul.addr %s272, 8
      %s274 = scalar_lea.vmem %s1, %s273
      %s275 = sadd.s32 %s19, 1
      %s276 = smul.u32 %s275, 8
      %s277 = sadd.s32 %s18, %s19
      %p278 = scmp.lt.s32.totalorder %s277, 1
      %s279 = scalar_select %p278, %s277, 1
      %s280 = smul.addr %s279, 2
      %s281 = scalar_lea.vmem %s3, %s280
      %s282 = sadd.s32 %s18, %s19
      %v283 = vld [vmem:[%s256] sm:$0xff]
      %v284 = vld [vmem:[%s256 + $0x8] sm:$0x1]
      %v285 = vld [vmem:[%s256 + $0x10] sm:$0xff]
      %v286 = vld [vmem:[%s256 + $0x18] sm:$0x1]
      %v287 = vld [vmem:[%s256 + $0x20] sm:$0xff]
      %v288 = vld [vmem:[%s256 + $0x28] sm:$0x1]
      %v289 = vld [vmem:[%s256 + $0x30] sm:$0xff]
      %v290 = vld [vmem:[%s256 + $0x38] sm:$0x1]
      %v291 = vld [vmem:[%s256 + $0x40] sm:$0xff]
      %v292 = vld [vmem:[%s256 + $0x48] sm:$0x1]
      %v293 = vld [vmem:[%s256 + $0x50] sm:$0xff]
      %v294 = vld [vmem:[%s256 + $0x58] sm:$0x1]
      %v295 = vld [vmem:[%s256 + $0x60] sm:$0xff]
      %v296 = vld [vmem:[%s256 + $0x68] sm:$0x1]
      %v297 = vld [vmem:[%s256 + $0x70] sm:$0xff]
      %v298 = vld [vmem:[%s256 + $0x78] sm:$0x1]
      %v299 = vld [vmem:[%s256 + $0x80] sm:$0xff]
      %v300 = vld [vmem:[%s256 + $0x88] sm:$0x1]
      %v301 = vld [vmem:[%s256 + $0x90] sm:$0xff]
      %v302 = vld [vmem:[%s256 + $0x98] sm:$0x1]
      %v303 = vld [vmem:[%s256 + $0xa0] sm:$0xff]
      %v304 = vld [vmem:[%s256 + $0xa8] sm:$0x1]
      %v305 = vld [vmem:[%s256 + $0xb0] sm:$0xff]
      %v306 = vld [vmem:[%s256 + $0xb8] sm:$0x1]
      %v307 = vld [vmem:[%s256 + $0xc0] sm:$0xff]
      %v308 = vld [vmem:[%s256 + $0xc8] sm:$0x1]
      %v309 = vld [vmem:[%s256 + $0xd0] sm:$0xff]
      %v310 = vld [vmem:[%s256 + $0xd8] sm:$0x1]
      %v311 = vld [vmem:[%s256 + $0xe0] sm:$0xff]
      %v312 = vld [vmem:[%s256 + $0xe8] sm:$0x1]
      %v313 = vld [vmem:[%s256 + $0xf0] sm:$0xff]
      %v314 = vld [vmem:[%s256 + $0xf8] sm:$0x1]
      %v315 = vld [vmem:[%s274] sm:$0xff]
      %v316 = vld [vmem:[%s274 + $0x8] sm:$0x1]
      %vm333 = vcmask 1046528
      %v334 = vrot.slane %v283, 1
      %v335 = vrot.slane %v284, 1
      %v336 = vsel %vm333, %v334, %v335
      %v337 = vrot.slane %v287, 1
      %v338 = vrot.slane %v288, 1
      %v339 = vsel %vm333, %v337, %v338
      %v340 = vrot.slane %v291, 1
      %v341 = vrot.slane %v292, 1
      %v342 = vsel %vm333, %v340, %v341
      %v343 = vrot.slane %v295, 1
      %v344 = vrot.slane %v296, 1
      %v345 = vsel %vm333, %v343, %v344
      %v346 = vrot.slane %v299, 1
      %v347 = vrot.slane %v300, 1
      %v348 = vsel %vm333, %v346, %v347
      %v349 = vrot.slane %v303, 1
      %v350 = vrot.slane %v304, 1
      %v351 = vsel %vm333, %v349, %v350
      %v352 = vrot.slane %v307, 1
      %v353 = vrot.slane %v308, 1
      %v354 = vsel %vm333, %v352, %v353
      %v355 = vrot.slane %v311, 1
      %v356 = vrot.slane %v312, 1
      %v357 = vsel %vm333, %v355, %v356
      %358 = vrot.lane.b32.xlu0 %v336, 8
      %v359 = vpop.permute.xlu0 %358
      %360 = vrot.lane.b32.xlu0 %v339, 8
      %v361 = vpop.permute.xlu0 %360
      %362 = vrot.lane.b32.xlu0 %v342, 8
      %v363 = vpop.permute.xlu0 %362
      %364 = vrot.lane.b32.xlu0 %v345, 8
      %v365 = vpop.permute.xlu0 %364
      %366 = vrot.lane.b32.xlu0 %v348, 8
      %v367 = vpop.permute.xlu0 %366
      %368 = vrot.lane.b32.xlu0 %v351, 8
      %v369 = vpop.permute.xlu0 %368
      %370 = vrot.lane.b32.xlu0 %v354, 8
      %v371 = vpop.permute.xlu0 %370
      %372 = vrot.lane.b32.xlu0 %v357, 8
      %v373 = vpop.permute.xlu0 %372
      %390 = vrot.lane.b32.xlu0 %v285, 12
      %v391 = vpop.permute.xlu0 %390
      %392 = vrot.lane.b32.xlu0 %v289, 12
      %v393 = vpop.permute.xlu0 %392
      %394 = vrot.lane.b32.xlu0 %v293, 12
      %v395 = vpop.permute.xlu0 %394
      %396 = vrot.lane.b32.xlu0 %v297, 12
      %v397 = vpop.permute.xlu0 %396
      %398 = vrot.lane.b32.xlu0 %v301, 12
      %v399 = vpop.permute.xlu0 %398
      %400 = vrot.lane.b32.xlu0 %v305, 12
      %v401 = vpop.permute.xlu0 %400
      %402 = vrot.lane.b32.xlu0 %v309, 12
      %v403 = vpop.permute.xlu0 %402
      %404 = vrot.lane.b32.xlu0 %v313, 12
      %v405 = vpop.permute.xlu0 %404
      %v422 = vrot.slane %v285, 1
      %v423 = vrot.slane %v286, 1
      %v424 = vsel %vm333, %v422, %v423
      %v425 = vrot.slane %v289, 1
      %v426 = vrot.slane %v290, 1
      %v427 = vsel %vm333, %v425, %v426
      %v428 = vrot.slane %v293, 1
      %v429 = vrot.slane %v294, 1
      %v430 = vsel %vm333, %v428, %v429
      %v431 = vrot.slane %v297, 1
      %v432 = vrot.slane %v298, 1
      %v433 = vsel %vm333, %v431, %v432
      %v434 = vrot.slane %v301, 1
      %v435 = vrot.slane %v302, 1
      %v436 = vsel %vm333, %v434, %v435
      %v437 = vrot.slane %v305, 1
      %v438 = vrot.slane %v306, 1
      %v439 = vsel %vm333, %v437, %v438
      %v440 = vrot.slane %v309, 1
      %v441 = vrot.slane %v310, 1
      %v442 = vsel %vm333, %v440, %v441
      %v443 = vrot.slane %v313, 1
      %v444 = vrot.slane %v314, 1
      %v445 = vsel %vm333, %v443, %v444
      %446 = vrot.lane.b32.xlu0 %v424, 20
      %v447 = vpop.permute.xlu0 %446
      %448 = vrot.lane.b32.xlu0 %v427, 20
      %v449 = vpop.permute.xlu0 %448
      %450 = vrot.lane.b32.xlu0 %v430, 20
      %v451 = vpop.permute.xlu0 %450
      %452 = vrot.lane.b32.xlu0 %v433, 20
      %v453 = vpop.permute.xlu0 %452
      %454 = vrot.lane.b32.xlu0 %v436, 20
      %v455 = vpop.permute.xlu0 %454
      %456 = vrot.lane.b32.xlu0 %v439, 20
      %v457 = vpop.permute.xlu0 %456
      %458 = vrot.lane.b32.xlu0 %v442, 20
      %v459 = vpop.permute.xlu0 %458
      %460 = vrot.lane.b32.xlu0 %v445, 20
      %v461 = vpop.permute.xlu0 %460
      %471 = vrot.lane.b32.xlu0 %v287, 24
      %v472 = vpop.permute.xlu0 %471
      %473 = vrot.lane.b32.xlu0 %v291, 24
      %v474 = vpop.permute.xlu0 %473
      %475 = vrot.lane.b32.xlu0 %v295, 24
      %v476 = vpop.permute.xlu0 %475
      %477 = vrot.lane.b32.xlu0 %v299, 24
      %v478 = vpop.permute.xlu0 %477
      %479 = vrot.lane.b32.xlu0 %v303, 24
      %v480 = vpop.permute.xlu0 %479
      %481 = vrot.lane.b32.xlu0 %v307, 24
      %v482 = vpop.permute.xlu0 %481
      %483 = vrot.lane.b32.xlu0 %v311, 24
      %v484 = vpop.permute.xlu0 %483
      %485 = vrot.lane.b32.xlu0 %v315, 24
      %v486 = vpop.permute.xlu0 %485
      %v496 = vrot.slane %v315, 1
      %v497 = vrot.slane %v316, 1
      %v498 = vsel %vm333, %v496, %v497
      %499 = vrot.lane.b32.xlu0 %v339, 32
      %v500 = vpop.permute.xlu0 %499
      %501 = vrot.lane.b32.xlu0 %v342, 32
      %v502 = vpop.permute.xlu0 %501
      %503 = vrot.lane.b32.xlu0 %v345, 32
      %v504 = vpop.permute.xlu0 %503
      %505 = vrot.lane.b32.xlu0 %v348, 32
      %v506 = vpop.permute.xlu0 %505
      %507 = vrot.lane.b32.xlu0 %v351, 32
      %v508 = vpop.permute.xlu0 %507
      %509 = vrot.lane.b32.xlu0 %v354, 32
      %v510 = vpop.permute.xlu0 %509
      %511 = vrot.lane.b32.xlu0 %v357, 32
      %v512 = vpop.permute.xlu0 %511
      %513 = vrot.lane.b32.xlu0 %v498, 32
      %v514 = vpop.permute.xlu0 %513
      %vm523 = vcmask 64512
      %v524 = vsel %vm523, %v283, %v359
      %v525 = vsel %vm523, %v287, %v361
      %v526 = vsel %vm523, %v291, %v363
      %v527 = vsel %vm523, %v295, %v365
      %v528 = vsel %vm523, %v299, %v367
      %v529 = vsel %vm523, %v303, %v369
      %v530 = vsel %vm523, %v307, %v371
      %v531 = vsel %vm523, %v311, %v373
      %vm532 = vcmask 97280
      %v533 = vsel %vm532, %v524, %v391
      %v534 = vsel %vm532, %v525, %v393
      %v535 = vsel %vm532, %v526, %v395
      %v536 = vsel %vm532, %v527, %v397
      %v537 = vsel %vm532, %v528, %v399
      %v538 = vsel %vm532, %v529, %v401
      %v539 = vsel %vm532, %v530, %v403
      %v540 = vsel %vm532, %v531, %v405
      %vm541 = vcmask 130048
      %v542 = vsel %vm541, %v533, %v391
      %v543 = vsel %vm541, %v534, %v393
      %v544 = vsel %vm541, %v535, %v395
      %v545 = vsel %vm541, %v536, %v397
      %v546 = vsel %vm541, %v537, %v399
      %v547 = vsel %vm541, %v538, %v401
      %v548 = vsel %vm541, %v539, %v403
      %v549 = vsel %vm541, %v540, %v405
      %vm550 = vcmask 162816
      %v551 = vsel %vm550, %v542, %v447
      %v552 = vsel %vm550, %v543, %v449
      %v553 = vsel %vm550, %v544, %v451
      %v554 = vsel %vm550, %v545, %v453
      %v555 = vsel %vm550, %v546, %v455
      %v556 = vsel %vm550, %v547, %v457
      %v557 = vsel %vm550, %v548, %v459
      %v558 = vsel %vm550, %v549, %v461
      %vm559 = vcmask 195584
      %v560 = vsel %vm559, %v551, %v472
      %v561 = vsel %vm559, %v552, %v474
      %v562 = vsel %vm559, %v553, %v476
      %v563 = vsel %vm559, %v554, %v478
      %v564 = vsel %vm559, %v555, %v480
      %v565 = vsel %vm559, %v556, %v482
      %v566 = vsel %vm559, %v557, %v484
      %v567 = vsel %vm559, %v558, %v486
      %vm568 = vcmask 228352
      %v569 = vsel %vm568, %v560, %v472
      %v570 = vsel %vm568, %v561, %v474
      %v571 = vsel %vm568, %v562, %v476
      %v572 = vsel %vm568, %v563, %v478
      %v573 = vsel %vm568, %v564, %v480
      %v574 = vsel %vm568, %v565, %v482
      %v575 = vsel %vm568, %v566, %v484
      %v576 = vsel %vm568, %v567, %v486
      %vm577 = vcmask 261120
      %v578 = vsel %vm577, %v569, %v500
      %v579 = vsel %vm577, %v570, %v502
      %v580 = vsel %vm577, %v571, %v504
      %v581 = vsel %vm577, %v572, %v506
      %v582 = vsel %vm577, %v573, %v508
      %v583 = vsel %vm577, %v574, %v510
      %v584 = vsel %vm577, %v575, %v512
      %v585 = vsel %vm577, %v576, %v514
      %v586 = vld [vmem:[%s2] sm:$0xff]
      %v587 = vld [vmem:[%s2 + $0x8] sm:$0xff]
      %v588 = vld [vmem:[%s2 + $0x10] sm:$0xff]
      %v589 = vld [vmem:[%s2 + $0x18] sm:$0xff]
      %v590 = vld [vmem:[%s2 + $0x20] sm:$0xf]
      %vm591 = vcmask 293888
      %v593 = vsel %vm591, %v578, 0
      %v596 = vsel %vm591, %v579, 0
      %v599 = vsel %vm591, %v580, 0
      %v602 = vsel %vm591, %v581, 0
      %v605 = vsel %vm591, %v582, 0
      %v608 = vsel %vm591, %v583, 0
      %v611 = vsel %vm591, %v584, 0
      %v614 = vsel %vm591, %v585, 0
      %vm616 = vcmask 1043456
      %v618 = vsel %vm616, %v590, 0
      %620 = vmatprep.subr.mxu0 0.0
      %621 = vmatpush1.msra.mxu0 %v586
      %622 = vmatprep.subr.mxu0 0.0
      %623 = vmatpush1.msra.mxu0 %v587
      %624 = vmatprep.subr.mxu0 0.0
      %625 = vmatpush1.msra.mxu0 %v588
      %626 = vmatprep.subr.mxu0 0.0
      %627 = vmatpush1.msra.mxu0 %v589
      %628 = vmatprep.subr.mxu0 0.0
      %629 = vmatpush1.msra.mxu0 %v618
      %630 = vmatprep.subr.mxu0 0.0
      %631 = vmatpush1.msra.mxu0 0.0
      %632 = vmatprep.subr.mxu0 0.0
      %633 = vmatpush1.msra.mxu0 0.0
      %634 = vmatprep.subr.mxu0 0.0
      %635 = vmatpush1.msra.mxu0 0.0
      %636 = vmatprep.subr.mxu0 0.0
      %637 = vmatpush1.msra.mxu0 0.0
      %638 = vmatprep.subr.mxu0 0.0
      %639 = vmatpush1.msra.mxu0 0.0
      %640 = vmatprep.subr.mxu0 0.0
      %641 = vmatpush1.msra.mxu0 0.0
      %642 = vmatprep.subr.mxu0 0.0
      %643 = vmatpush1.msra.mxu0 0.0
      %644 = vmatprep.subr.mxu0 0.0
      %645 = vmatpush1.msra.mxu0 0.0
      %646 = vmatprep.subr.mxu0 0.0
      %647 = vmatpush1.msra.mxu0 0.0
      %648 = vmatprep.subr.mxu0 0.0
      %649 = vmatpush1.msra.mxu0 0.0
      %650 = vmatprep.subr.mxu0 0.0
      %651 = vmatpush1.msra.mxu0 0.0
      %652 = vmatprep.subr.mxu0 0.0
      %653 = vmatpush1.msra.mxu0 0.0
      %654 = vmatprep.subr.mxu0 0.0
      %655 = vmatpush1.msra.mxu0 0.0
      %656 = vmatprep.subr.mxu0 0.0
      %657 = vmatpush1.msra.mxu0 0.0
      %658 = vmatprep.subr.mxu0 0.0
      %659 = vmatpush1.msra.mxu0 0.0
      %660 = vmatprep.subr.mxu0 0.0
      %661 = vmatpush1.msra.mxu0 0.0
      %662 = vmatprep.subr.mxu0 0.0
      %663 = vmatpush1.msra.mxu0 0.0
      %664 = vmatprep.subr.mxu0 0.0
      %665 = vmatpush1.msra.mxu0 0.0
      %666 = vmatprep.subr.mxu0 0.0
      %667 = vmatpush1.msra.mxu0 0.0
      %668 = vmatprep.subr.mxu0 0.0
      %669 = vmatpush1.msra.mxu0 0.0
      %670 = vmatprep.subr.mxu0 0.0
      %671 = vmatpush1.msra.mxu0 0.0
      %672 = vmatprep.subr.mxu0 0.0
      %673 = vmatpush1.msra.mxu0 0.0
      %674 = vmatprep.subr.mxu0 0.0
      %675 = vmatpush1.msra.mxu0 0.0
      %676 = vmatprep.subr.mxu0 0.0
      %677 = vmatpush1.msra.mxu0 0.0
      %678 = vmatprep.subr.mxu0 0.0
      %679 = vmatpush1.msra.mxu0 0.0
      %680 = vmatprep.subr.mxu0 0.0
      %681 = vmatpush1.msra.mxu0 0.0
      %682 = vmatprep.subr.mxu0 0.0
      %683 = vmatpush1.msra.mxu0 0.0
      %684 = vmatprep.mubr.f32.mxu0 0.0
      %685 = vmatmul.mubr.f32.gmra.mrb[0].mxu0 %v593
      %v686 = vpop.f32.mrb[0].mxu0
      %v687 = vadd.f32 0.0, %v686
      %v688 = vpop.f32.mrb[0].mxu0
      %689 = vmatprep.mubr.f32.mxu0 0.0
      %690 = vmatmul.mubr.f32.gmra.mrb[0].mxu0 %v596
      %v691 = vpop.f32.mrb[0].mxu0
      %v692 = vadd.f32 0.0, %v691
      %v693 = vpop.f32.mrb[0].mxu0
      %694 = vmatprep.mubr.f32.mxu0 0.0
      %695 = vmatmul.mubr.f32.gmra.mrb[0].mxu0 %v599
      %v696 = vpop.f32.mrb[0].mxu0
      %v697 = vadd.f32 0.0, %v696
      %v698 = vpop.f32.mrb[0].mxu0
      %699 = vmatprep.mubr.f32.mxu0 0.0
      %700 = vmatmul.mubr.f32.gmra.mrb[0].mxu0 %v602
      %v701 = vpop.f32.mrb[0].mxu0
      %v702 = vadd.f32 0.0, %v701
      %v703 = vpop.f32.mrb[0].mxu0
      %704 = vmatprep.mubr.f32.mxu0 0.0
      %705 = vmatmul.mubr.f32.gmra.mrb[0].mxu0 %v605
      %v706 = vpop.f32.mrb[0].mxu0
      %v707 = vadd.f32 0.0, %v706
      %v708 = vpop.f32.mrb[0].mxu0
      %709 = vmatprep.mubr.f32.mxu0 0.0
      %710 = vmatmul.mubr.f32.gmra.mrb[0].mxu0 %v608
      %v711 = vpop.f32.mrb[0].mxu0
      %v712 = vadd.f32 0.0, %v711
      %v713 = vpop.f32.mrb[0].mxu0
      %714 = vmatprep.mubr.f32.mxu0 0.0
      %715 = vmatmul.mubr.f32.gmra.mrb[0].mxu0 %v611
      %v716 = vpop.f32.mrb[0].mxu0
      %v717 = vadd.f32 0.0, %v716
      %v718 = vpop.f32.mrb[0].mxu0
      %719 = vmatprep.mubr.f32.mxu0 0.0
      %720 = vmatmul.mubr.f32.gmra.mrb[0].mxu0 %v614
      %v721 = vpop.f32.mrb[0].mxu0
      %v722 = vadd.f32 0.0, %v721
      %v723 = vpop.f32.mrb[0].mxu0
      %724 = vdwg.mxu0
      %725 = vrot.lane.b32.xlu0 %v424, 4
      %v726 = vpop.permute.xlu0 %725
      %727 = vrot.lane.b32.xlu0 %v427, 4
      %v728 = vpop.permute.xlu0 %727
      %729 = vrot.lane.b32.xlu0 %v430, 4
      %v730 = vpop.permute.xlu0 %729
      %731 = vrot.lane.b32.xlu0 %v433, 4
      %v732 = vpop.permute.xlu0 %731
      %733 = vrot.lane.b32.xlu0 %v436, 4
      %v734 = vpop.permute.xlu0 %733
      %735 = vrot.lane.b32.xlu0 %v439, 4
      %v736 = vpop.permute.xlu0 %735
      %737 = vrot.lane.b32.xlu0 %v442, 4
      %v738 = vpop.permute.xlu0 %737
      %739 = vrot.lane.b32.xlu0 %v445, 4
      %v740 = vpop.permute.xlu0 %739
      %v749 = vmax.f32 %v285, %v726
      %v750 = vmax.f32 %v289, %v728
      %v751 = vmax.f32 %v293, %v730
      %v752 = vmax.f32 %v297, %v732
      %v753 = vmax.f32 %v301, %v734
      %v754 = vmax.f32 %v305, %v736
      %v755 = vmax.f32 %v309, %v738
      %v756 = vmax.f32 %v313, %v740
      %757 = vrot.lane.b32.xlu0 %v339, 4
      %v758 = vpop.permute.xlu0 %757
      %759 = vrot.lane.b32.xlu0 %v342, 4
      %v760 = vpop.permute.xlu0 %759
      %761 = vrot.lane.b32.xlu0 %v345, 4
      %v762 = vpop.permute.xlu0 %761
      %763 = vrot.lane.b32.xlu0 %v348, 4
      %v764 = vpop.permute.xlu0 %763
      %765 = vrot.lane.b32.xlu0 %v351, 4
      %v766 = vpop.permute.xlu0 %765
      %767 = vrot.lane.b32.xlu0 %v354, 4
      %v768 = vpop.permute.xlu0 %767
      %769 = vrot.lane.b32.xlu0 %v357, 4
      %v770 = vpop.permute.xlu0 %769
      %771 = vrot.lane.b32.xlu0 %v498, 4
      %v772 = vpop.permute.xlu0 %771
      %v781 = vmax.f32 %v287, %v758
      %v782 = vmax.f32 %v291, %v760
      %v783 = vmax.f32 %v295, %v762
      %v784 = vmax.f32 %v299, %v764
      %v785 = vmax.f32 %v303, %v766
      %v786 = vmax.f32 %v307, %v768
      %v787 = vmax.f32 %v311, %v770
      %v788 = vmax.f32 %v315, %v772
      %v789 = vmax.f32 %v749, %v781
      %v790 = vmax.f32 %v750, %v782
      %v791 = vmax.f32 %v751, %v783
      %v792 = vmax.f32 %v752, %v784
      %v793 = vmax.f32 %v753, %v785
      %v794 = vmax.f32 %v754, %v786
      %v795 = vmax.f32 %v755, %v787
      %v796 = vmax.f32 %v756, %v788
      %805 = vrot.lane.b32.xlu0 %v789, 8
      %v806 = vpop.permute.xlu0 %805
      %807 = vrot.lane.b32.xlu0 %v790, 8
      %v808 = vpop.permute.xlu0 %807
      %809 = vrot.lane.b32.xlu0 %v791, 8
      %v810 = vpop.permute.xlu0 %809
      %811 = vrot.lane.b32.xlu0 %v792, 8
      %v812 = vpop.permute.xlu0 %811
      %813 = vrot.lane.b32.xlu0 %v793, 8
      %v814 = vpop.permute.xlu0 %813
      %815 = vrot.lane.b32.xlu0 %v794, 8
      %v816 = vpop.permute.xlu0 %815
      %817 = vrot.lane.b32.xlu0 %v795, 8
      %v818 = vpop.permute.xlu0 %817
      %819 = vrot.lane.b32.xlu0 %v796, 8
      %v820 = vpop.permute.xlu0 %819
      %v829 = vsel %vm532, %v687, %v806
      %v830 = vsel %vm532, %v692, %v808
      %v831 = vsel %vm532, %v697, %v810
      %v832 = vsel %vm532, %v702, %v812
      %v833 = vsel %vm532, %v707, %v814
      %v834 = vsel %vm532, %v712, %v816
      %v835 = vsel %vm532, %v717, %v818
      %v836 = vsel %vm532, %v722, %v820
      %v837 = vsel %vm541, %v829, 0.0
      %v838 = vsel %vm541, %v830, 0.0
      %v839 = vadd.f32 %v837, %v838
      %v840 = vsel %vm541, %v831, 0.0
      %v841 = vadd.f32 %v839, %v840
      %v842 = vsel %vm541, %v832, 0.0
      %v843 = vadd.f32 %v841, %v842
      %v844 = vsel %vm541, %v833, 0.0
      %v845 = vadd.f32 %v843, %v844
      %v846 = vsel %vm541, %v834, 0.0
      %v847 = vadd.f32 %v845, %v846
      %v848 = vsel %vm541, %v835, 0.0
      %v849 = vadd.f32 %v847, %v848
      %v850 = vsel %vm541, %v836, 0.0
      %v851 = vadd.f32 %v849, %v850
      %v852 = vrot.slane %v851, 4
      %v853 = vadd.f32 %v851, %v852
      %v854 = vrot.slane %v853, 2
      %v855 = vadd.f32 %v853, %v854
      %v856 = vrot.slane %v855, 1
      %v857 = vadd.f32 %v855, %v856
      %v858 = vmul.f32 %v829, %v829
      %v859 = vmul.f32 %v830, %v830
      %v860 = vmul.f32 %v831, %v831
      %v861 = vmul.f32 %v832, %v832
      %v862 = vmul.f32 %v833, %v833
      %v863 = vmul.f32 %v834, %v834
      %v864 = vmul.f32 %v835, %v835
      %v865 = vmul.f32 %v836, %v836
      %v866 = vsel %vm541, %v858, 0.0
      %v867 = vsel %vm541, %v859, 0.0
      %v868 = vadd.f32 %v866, %v867
      %v869 = vsel %vm541, %v860, 0.0
      %v870 = vadd.f32 %v868, %v869
      %v871 = vsel %vm541, %v861, 0.0
      %v872 = vadd.f32 %v870, %v871
      %v873 = vsel %vm541, %v862, 0.0
      %v874 = vadd.f32 %v872, %v873
      %v875 = vsel %vm541, %v863, 0.0
      %v876 = vadd.f32 %v874, %v875
      %v877 = vsel %vm541, %v864, 0.0
      %v878 = vadd.f32 %v876, %v877
      %v879 = vsel %vm541, %v865, 0.0
      %v880 = vadd.f32 %v878, %v879
      %v881 = vrot.slane %v880, 4
      %v882 = vadd.f32 %v880, %v881
      %v883 = vrot.slane %v882, 2
      %v884 = vadd.f32 %v882, %v883
      %v885 = vrot.slane %v884, 1
      %v886 = vadd.f32 %v884, %v885
      %vm887 = vcmask 1040384
      %v888 = vsel %vm887, %v857, %v886
      %vm889 = vcmask 123904
      %890 = vst.msk [vmem:[%s281] sm:$0x3] %vm889, %v888
      %s891 = sadd.s32 %s18, %s19
      %p892 = scmp.lt.s32.totalorder %s891, 1
      %s893 = scalar_select %p892, %s891, 1
      %s894 = smul.addr %s893, 2
      %s895 = scalar_lea.vmem %s3, %s894
      // Predicated region
      $region33: #{downsampler_block.2} parent=31 // pred_check
        %p896 = pneg %p127
      $region34: #{downsampler_block.2} parent=31 // pred_check_branch
        %898 = sbr.rel (%p896) target = $region36
      $region35: #{downsampler_block.2} parent=31 // pred_region
        %s899 = sadd.s32 %s18, %s19
      $region36: #{downsampler_block.2} parent=31 // pred_fallthru
        _
    $region32: #{downsampler_block.2} parent=5 // pred_fallthru
      _
    %p900 = scmp.le.s32.totalorder 2, %s9
    // Predicated region
    $region37: #{downsampler_block.2} parent=5 // pred_check
      %p901 = pneg %p900
    $region38: #{downsampler_block.2} parent=5 // pred_check_branch
      %903 = sbr.rel (%p901) target = $region40
    $region39: #{downsampler_block.2} parent=5 // pred_region
      %s904 = ssub.s32 %s9, 2
      // Predicated region
      $region41: #{downsampler_block.2} parent=39 // pred_check
        %p905 = pneg %p133
      $region42: #{downsampler_block.2} parent=39 // pred_check_branch
        %907 = sbr.rel (%p905) target = $region44
      $region43: #{downsampler_block.2} parent=39 // pred_region
        %s908 = sadd.s32 %s20, %s21
        %p909 = scmp.lt.s32.totalorder %s908, 1
        %s910 = scalar_select %p909, %s908, 1
        %s911 = smul.addr %s910, 2
        %s912 = scalar_lea.vmem %s3, %s911
      $region44: #{downsampler_block.2} parent=39 // pred_fallthru
        _
    $region40: #{downsampler_block.2} parent=5 // pred_fallthru
      _
  $region6: #{downsampler_block.2} parent=0 // loop_footer
    %s13 = sadd.s32 1, %s9
  $region7: #{downsampler_block.2} parent=0 // loop_footer_branch
    %8 = sbr.rel target = $region3
  $region8: #{downsampler_block.2} parent=0 // loop_exit
    _

// kernel: downsampler_block.3
$region0: #{downsampler_block.3}
  #allocation0 [shape = 'u32[]', space=smem, size = 0x4, offset = 0x4, fixed_abs, tag = 'smem constant byte address 0x4 - core index']
  #allocation1 [shape = 'u32[144,128]{1,0:T(1,128)}', space=vmem, size = 0x12000, scoped, tag = 'internal scratch']
  %s0 = inlined_call_operand.vmem [shape: f32[2,9,2,9,8], index: 0, kind: input, shape index: {}, may-alias: {0,1}]
  %s1 = inlined_call_operand.vmem [shape: f32[2,9,2,9,8], index: 1, kind: input, shape index: {}, may-alias: {0,1}]
  %s2 = inlined_call_operand.vmem [shape: f32[36,12], index: 2, kind: input, shape index: {}]
  %s3 = inlined_call_operand.vmem [shape: f32[1,16], index: 3, kind: input, shape index: {}]
  %s4 = inlined_call_operand.vmem [shape: f32[1,16], index: 4, kind: input, shape index: {}]
  %s5 = inlined_call_operand.hbm [shape: f32[128,16], index: 5, kind: output, shape index: {}]
  %s6 = sld [smem:[#allocation0]]
  $region53: #{downsampler_block.3} parent=0
    _
  %s8 = ssub.s32 1, %s6
  %s9 = scalar_select 0, %s8, %s6
  $region1: #{downsampler_block.3} parent=0
    #allocation2 [shape = 'u8[65536]{0}', space=vmem, size = 0x10000, scoped, tag = 'output window, operand 0']
    #allocation3 [shape = 's32[2]{0}', space=sflag, size = 0x8, scoped, tag = 'scoped memory for downsampler_block.3']
    %10 = vsyncpa [#allocation3], 0
    %s11 = scalar_lea.sflag [#allocation3], 1
    %12 = vsyncpa %s11, 0
    loop: start=0, step=1, limit=4
    $region2: #{downsampler_block.3} parent=1 // loop_pre_header
      _
    $region3: #{downsampler_block.3} parent=1 // loop_header
      %s14 = sphi 0, %s18
      %p15 = scmp.ge.s32.totalorder %s14, 4
      %s21 = sphi 0, %s33
      %s22 = sphi 0, %s29
      %s23 = sphi 0, %s21
      %s24 = sphi 0, %s22
      %s25 = sphi 0, %s23
      %s26 = sphi 0, %s24
      %s38 = sphi 0, %s40
      %s41 = sphi 0, %s38
      %s42 = sphi 0, %s41
      %s58 = sphi 0, %s42
      %s70 = sphi 0, %s72
      %s73 = sphi 0, %s70
      %s74 = sphi 0, %s73
      %s90 = sphi 0, %s74
      %s94 = sphi 0, %s94
      %s96 = sphi 0, %s94
      %s97 = sphi 0, %s96
      %s111 = sphi 0, %s97
      %s115 = sphi 0, %s115
      %s117 = sphi 0, %s115
      %s118 = sphi 0, %s117
      %s132 = sphi 0, %s118
      %s136 = sphi 0, %s136
      %s138 = sphi 0, %s136
      %s139 = sphi 0, %s138
      %s153 = sphi 0, %s139
      %s161 = sphi 0, %s163
      %s164 = sphi 0, %s161
      %s165 = sphi 0, %s164
      %s181 = sphi 0, %s165
    $region4: #{downsampler_block.3} parent=1 // loop_header_branch
      %17 = sbr.rel (%p15) target = $region8
    $region5: #{downsampler_block.3} parent=1 // loop_body
      %s19 = ssub.s32 %s14, 1
      %s20 = ssub.s32 %s14, 2
      %s27 = sadd.s32 1, %s22
      %p28 = scmp.ge.s32.totalorder %s27, 1
      %s29 = scalar_select %p28, 0, %s27
      %s30 = sadd.s32 1, %s21
      %s31 = scalar_select %p28, %s30, %s21
      %p32 = scmp.ge.s32.totalorder %s31, 2
      %s33 = scalar_select %p32, 0, %s31
      %s34 = ssub.s32 %s21, %s33
      %s35 = ssub.s32 %s22, %s29
      %s36 = sor.u32 %s34, %s35
      %p37 = scmp.eq.s32.totalorder %s36, 0
      %s39 = sadd.s32 %s38, 1
      %s40 = scalar_select %p37, %s38, %s39
      %p43 = pneg %p37
      %p44 = scmp.eq.s32.totalorder %s14, 1
      %p45 = por %p43, %p44
      %p46 = scmp.ne.s32.totalorder %s38, %s41
      %p47 = scmp.eq.s32.totalorder %s14, 0
      %p48 = por %p46, %p47
      %p49 = scmp.ne.s32.totalorder %s38, %s41
      %p50 = scmp.eq.s32.totalorder %s19, 1
      %p51 = por %p49, %p50
      %p52 = scmp.ne.s32.totalorder %s41, %s42
      %p53 = scmp.eq.s32.totalorder %s19, 0
      %p54 = por %p52, %p53
      %p55 = scmp.ne.s32.totalorder %s41, %s42
      %p56 = scmp.eq.s32.totalorder %s20, 1
      %p57 = por %p55, %p56
      %p59 = scmp.ne.s32.totalorder %s42, %s58
      %p60 = scmp.eq.s32.totalorder %s20, 0
      %p61 = por %p59, %p60
      %s62 = sadd.s32 %s22, 1
      %s63 = smul.u32 %s62, 8
      %s64 = sadd.s32 %s29, 1
      %s65 = smul.u32 %s64, 8
      %s66 = ssub.s32 %s21, %s33
      %s67 = ssub.s32 %s63, %s65
      %s68 = sor.u32 %s66, %s67
      %p69 = scmp.eq.s32.totalorder %s68, 0
      %s71 = sadd.s32 %s70, 1
      %s72 = scalar_select %p69, %s70, %s71
      %p75 = pneg %p69
      %p76 = scmp.eq.s32.totalorder %s14, 1
      %p77 = por %p75, %p76
      %p78 = scmp.ne.s32.totalorder %s70, %s73
      %p79 = scmp.eq.s32.totalorder %s14, 0
      %p80 = por %p78, %p79
      %p81 = scmp.ne.s32.totalorder %s70, %s73
      %p82 = scmp.eq.s32.totalorder %s19, 1
      %p83 = por %p81, %p82
      %p84 = scmp.ne.s32.totalorder %s73, %s74
      %p85 = scmp.eq.s32.totalorder %s19, 0
      %p86 = por %p84, %p85
      %p87 = scmp.ne.s32.totalorder %s73, %s74
      %p88 = scmp.eq.s32.totalorder %s20, 1
      %p89 = por %p87, %p88
      %p91 = scmp.ne.s32.totalorder %s74, %s90
      %p92 = scmp.eq.s32.totalorder %s20, 0
      %p93 = por %p91, %p92
      %s95 = sadd.s32 %s94, 1
      %p98 = scmp.eq.s32.totalorder %s14, 1
      %p99 = scmp.ne.s32.totalorder %s94, %s96
      %p100 = scmp.eq.s32.totalorder %s14, 0
      %p101 = por %p99, %p100
      %p102 = scmp.ne.s32.totalorder %s94, %s96
      %p103 = scmp.eq.s32.totalorder %s19, 1
      %p104 = por %p102, %p103
      %p105 = scmp.ne.s32.totalorder %s96, %s97
      %p106 = scmp.eq.s32.totalorder %s19, 0
      %p107 = por %p105, %p106
      %p108 = scmp.ne.s32.totalorder %s96, %s97
      %p109 = scmp.eq.s32.totalorder %s20, 1
      %p110 = por %p108, %p109
      %p112 = scmp.ne.s32.totalorder %s97, %s111
      %p113 = scmp.eq.s32.totalorder %s20, 0
      %p114 = por %p112, %p113
      %s116 = sadd.s32 %s115, 1
      %p119 = scmp.eq.s32.totalorder %s14, 1
      %p120 = scmp.ne.s32.totalorder %s115, %s117
      %p121 = scmp.eq.s32.totalorder %s14, 0
      %p122 = por %p120, %p121
      %p123 = scmp.ne.s32.totalorder %s115, %s117
      %p124 = scmp.eq.s32.totalorder %s19, 1
      %p125 = por %p123, %p124
      %p126 = scmp.ne.s32.totalorder %s117, %s118
      %p127 = scmp.eq.s32.totalorder %s19, 0
      %p128 = por %p126, %p127
      %p129 = scmp.ne.s32.totalorder %s117, %s118
      %p130 = scmp.eq.s32.totalorder %s20, 1
      %p131 = por %p129, %p130
      %p133 = scmp.ne.s32.totalorder %s118, %s132
      %p134 = scmp.eq.s32.totalorder %s20, 0
      %p135 = por %p133, %p134
      %s137 = sadd.s32 %s136, 1
      %p140 = scmp.eq.s32.totalorder %s14, 1
      %p141 = scmp.ne.s32.totalorder %s136, %s138
      %p142 = scmp.eq.s32.totalorder %s14, 0
      %p143 = por %p141, %p142
      %p144 = scmp.ne.s32.totalorder %s136, %s138
      %p145 = scmp.eq.s32.totalorder %s19, 1
      %p146 = por %p144, %p145
      %p147 = scmp.ne.s32.totalorder %s138, %s139
      %p148 = scmp.eq.s32.totalorder %s19, 0
      %p149 = por %p147, %p148
      %p150 = scmp.ne.s32.totalorder %s138, %s139
      %p151 = scmp.eq.s32.totalorder %s20, 1
      %p152 = por %p150, %p151
      %p154 = scmp.ne.s32.totalorder %s139, %s153
      %p155 = scmp.eq.s32.totalorder %s20, 0
      %p156 = por %p154, %p155
      %s157 = sadd.s32 %s21, %s22
      %s158 = sadd.s32 %s33, %s29
      %s159 = ssub.s32 %s157, %s158
      %p160 = scmp.eq.s32.totalorder %s159, 0
      %s162 = sadd.s32 %s161, 1
      %s163 = scalar_select %p160, %s161, %s162
      %p166 = pneg %p160
      %p167 = scmp.eq.s32.totalorder %s14, 1
      %p168 = por %p166, %p167
      %p169 = scmp.ne.s32.totalorder %s161, %s164
      %p170 = scmp.eq.s32.totalorder %s14, 0
      %p171 = por %p169, %p170
      %p172 = scmp.ne.s32.totalorder %s161, %s164
      %p173 = scmp.eq.s32.totalorder %s19, 1
      %p174 = por %p172, %p173
      %p175 = scmp.ne.s32.totalorder %s164, %s165
      %p176 = scmp.eq.s32.totalorder %s19, 0
      %p177 = por %p175, %p176
      %p178 = scmp.ne.s32.totalorder %s164, %s165
      %p179 = scmp.eq.s32.totalorder %s20, 1
      %p180 = por %p178, %p179
      %p182 = scmp.ne.s32.totalorder %s165, %s181
      %p183 = scmp.eq.s32.totalorder %s20, 0
      %p184 = por %p182, %p183
      %p185 = scmp.le.s32.totalorder 1, %s14
      %p186 = scmp.lt.s32.totalorder %s14, 3
      %p187 = pnand %p185, %p186
      %p188 = pneg %p187
      // Predicated region
      $region9: #{downsampler_block.3} parent=5 // pred_check
        _
      $region10: #{downsampler_block.3} parent=5 // pred_check_branch
        %190 = sbr.rel (%p187) target = $region12
      $region11: #{downsampler_block.3} parent=5 // pred_region
        %s191 = ssub.s32 %s14, 1
        // Predicated region
        $region13: #{downsampler_block.3} parent=11 // pred_check
          %p192 = pneg %p107
        $region14: #{downsampler_block.3} parent=11 // pred_check_branch
          %194 = sbr.rel (%p192) target = $region16
        $region15: #{downsampler_block.3} parent=11 // pred_region
          _
        $region16: #{downsampler_block.3} parent=11 // pred_fallthru
          _
        // Predicated region
        $region17: #{downsampler_block.3} parent=11 // pred_check
          %p195 = pneg %p128
        $region18: #{downsampler_block.3} parent=11 // pred_check_branch
          %197 = sbr.rel (%p195) target = $region20
        $region19: #{downsampler_block.3} parent=11 // pred_region
          _
        $region20: #{downsampler_block.3} parent=11 // pred_fallthru
          _
        // Predicated region
        $region21: #{downsampler_block.3} parent=11 // pred_check
          %p198 = pneg %p149
        $region22: #{downsampler_block.3} parent=11 // pred_check_branch
          %200 = sbr.rel (%p198) target = $region24
        $region23: #{downsampler_block.3} parent=11 // pred_region
          _
        $region24: #{downsampler_block.3} parent=11 // pred_fallthru
          _
      $region12: #{downsampler_block.3} parent=5 // pred_fallthru
        _
      %p201 = scmp.lt.s32.totalorder %s14, 2
      // Predicated region
      $region25: #{downsampler_block.3} parent=5 // pred_check
        %p202 = pneg %p201
      $region26: #{downsampler_block.3} parent=5 // pred_check_branch
        %204 = sbr.rel (%p202) target = $region28
      $region27: #{downsampler_block.3} parent=5 // pred_region
        // Predicated region
        $region29: #{downsampler_block.3} parent=27 // pred_check
          %p205 = pneg %p48
        $region30: #{downsampler_block.3} parent=27 // pred_check_branch
          %207 = sbr.rel (%p205) target = $region32
        $region31: #{downsampler_block.3} parent=27 // pred_region
          %s208 = smul.u32 8, %s22
          %s209 = ssub.s32 9, %s208
          %p210 = scmp.lt.s32.totalorder %s209, 8
          %s211 = scalar_select %p210, %s209, 8
          %s212 = smul.u32 128, %s211
          %s213 = smul.u32 %s212, 2
          %s214 = smul.u32 %s213, 2
          %p215 = scmp.lt.s32.totalorder %s21, 1
          %s216 = scalar_select %p215, %s21, 1
          %p217 = scmp.lt.s32.totalorder %s208, 8
          %s218 = scalar_select %p217, %s208, 8
          %s219 = smul.addr %s218, 4
          %s220 = smul.addr %s216, 36
          %s221 = sadd.s32 %s219, %s220
          %s222 = smul.addr %s221, 8
          %s223 = scalar_lea.vmem %s0, %s222
          %s224 = smul.u32 8, %s22
          %s225 = ssub.s32 9, %s224
          %p226 = scmp.lt.s32.totalorder %s225, 8
          %s227 = scalar_select %p226, %s225, 8
          %s228 = smul.u32 128, %s227
          %s229 = smul.u32 %s228, 2
          %s230 = smul.u32 %s229, 2
        $region32: #{downsampler_block.3} parent=27 // pred_fallthru
          _
        // Predicated region
        $region33: #{downsampler_block.3} parent=27 // pred_check
          %p231 = pneg %p80
        $region34: #{downsampler_block.3} parent=27 // pred_check_branch
          %233 = sbr.rel (%p231) target = $region36
        $region35: #{downsampler_block.3} parent=27 // pred_region
          %s234 = sadd.s32 %s22, 1
          %s235 = smul.u32 %s234, 8
          %p236 = scmp.lt.s32.totalorder %s21, 1
          %s237 = scalar_select %p236, %s21, 1
          %p238 = scmp.lt.s32.totalorder %s235, 8
          %s239 = scalar_select %p238, %s235, 8
          %s240 = smul.addr %s239, 4
          %s241 = smul.addr %s237, 36
          %s242 = sadd.s32 %s240, %s241
          %s243 = smul.addr %s242, 8
          %s244 = scalar_lea.vmem %s1, %s243
          %s245 = sadd.s32 %s22, 1
          %s246 = smul.u32 %s245, 8
        $region36: #{downsampler_block.3} parent=27 // pred_fallthru
          _
      $region28: #{downsampler_block.3} parent=5 // pred_fallthru
        _
      %p247 = scmp.le.s32.totalorder 1, %s14
      %p248 = scmp.lt.s32.totalorder %s14, 3
      %p249 = pnand %p247, %p248
      %p250 = pneg %p249
      // Predicated region
      $region37: #{downsampler_block.3} parent=5 // pred_check
        _
      $region38: #{downsampler_block.3} parent=5 // pred_check_branch
        %252 = sbr.rel (%p249) target = $region40
      $region39: #{downsampler_block.3} parent=5 // pred_region
        %s253 = ssub.s32 %s14, 1
        %s254 = smul.u32 8, %s24
        %s255 = ssub.s32 9, %s254
        %p256 = scmp.lt.s32.totalorder %s255, 8
        %s257 = scalar_select %p256, %s255, 8
        %s258 = smul.u32 128, %s257
        %s259 = smul.u32 %s258, 2
        %s260 = smul.u32 %s259, 2
        %p261 = scmp.lt.s32.totalorder %s23, 1
        %s262 = scalar_select %p261, %s23, 1
        %p263 = scmp.lt.s32.totalorder %s254, 8
        %s264 = scalar_select %p263, %s254, 8
        %s265 = smul.addr %s264, 4
        %s266 = smul.addr %s262, 36
        %s267 = sadd.s32 %s265, %s266
        %s268 = smul.addr %s267, 8
        %s269 = scalar_lea.vmem %s0, %s268
        %p270 = pneg %p54
        %p271 = pneg %p51
        %s272 = sadd.s32 %s24, 1
        %s273 = smul.u32 %s272, 8
        %p274 = scmp.lt.s32.totalorder %s23, 1
        %s275 = scalar_select %p274, %s23, 1
        %p276 = scmp.lt.s32.totalorder %s273, 8
        %s277 = scalar_select %p276, %s273, 8
        %s278 = smul.addr %s277, 4
        %s279 = smul.addr %s275, 36
        %s280 = sadd.s32 %s278, %s279
        %s281 = smul.addr %s280, 8
        %s282 = scalar_lea.vmem %s1, %s281
        %p283 = pneg %p86
        %p284 = pneg %p83
        %p285 = pneg %p107
        %p286 = pneg %p104
        %p287 = pneg %p128
        %p288 = pneg %p125
        %p289 = pneg %p149
        %p290 = pneg %p146
        %p291 = pneg %p177
        %p292 = pneg %p174
        %s293 = sand.u32 %s164, 1
        %s294 = scalar_lea.sflag [#allocation3], %s293
        %s295 = sand.u32 %s164, 1
        %s296 = smul.addr %s295, 64
        %s297 = scalar_lea.vmem [#allocation2], %s296
        %s298 = smul.u32 8, %s24
        %s299 = ssub.s32 9, %s298
        %p300 = scmp.lt.s32.totalorder %s299, 8
        %s301 = scalar_select %p300, %s299, 8
        %s302 = smul.u32 128, %s301
        %s303 = smul.u32 %s302, 2
        %s304 = smul.u32 %s303, 2
        %p305 = scmp.lt.s32.totalorder %s23, 1
        %s306 = scalar_select %p305, %s23, 1
        %p307 = scmp.lt.s32.totalorder %s298, 8
        %s308 = scalar_select %p307, %s298, 8
        %s309 = smul.addr %s308, 4
        %s310 = smul.addr %s306, 36
        %s311 = sadd.s32 %s309, %s310
        %s312 = smul.addr %s311, 8
        %s313 = scalar_lea.vmem %s0, %s312
        %s314 = smul.u32 8, %s24
        %s315 = ssub.s32 9, %s314
        %p316 = scmp.lt.s32.totalorder %s315, 8
        %s317 = scalar_select %p316, %s315, 8
        %s318 = smul.u32 128, %s317
        %s319 = smul.u32 %s318, 2
        %s320 = smul.u32 %s319, 2
        %s321 = sadd.s32 %s24, 1
        %s322 = smul.u32 %s321, 8
        %p323 = scmp.lt.s32.totalorder %s23, 1
        %s324 = scalar_select %p323, %s23, 1
        %p325 = scmp.lt.s32.totalorder %s322, 8
        %s326 = scalar_select %p325, %s322, 8
        %s327 = smul.addr %s326, 4
        %s328 = smul.addr %s324, 36
        %s329 = sadd.s32 %s327, %s328
        %s330 = smul.addr %s329, 8
        %s331 = scalar_lea.vmem %s1, %s330
        %s332 = sadd.s32 %s24, 1
        %s333 = smul.u32 %s332, 8
        %s334 = sadd.s32 %s23, %s24
        %s335 = smul.u32 8, %s334
        %v336 = vld [vmem:[%s313] sm:$0xff]
        %v337 = vld [vmem:[%s313 + $0x8] sm:$0x1]
        %v338 = vld [vmem:[%s313 + $0x10] sm:$0xff]
        %v339 = vld [vmem:[%s313 + $0x18] sm:$0x1]
        %v340 = vld [vmem:[%s313 + $0x20] sm:$0xff]
        %v341 = vld [vmem:[%s313 + $0x28] sm:$0x1]
        %v342 = vld [vmem:[%s313 + $0x30] sm:$0xff]
        %v343 = vld [vmem:[%s313 + $0x38] sm:$0x1]
        %v344 = vld [vmem:[%s313 + $0x40] sm:$0xff]
        %v345 = vld [vmem:[%s313 + $0x48] sm:$0x1]
        %v346 = vld [vmem:[%s313 + $0x50] sm:$0xff]
        %v347 = vld [vmem:[%s313 + $0x58] sm:$0x1]
        %v348 = vld [vmem:[%s313 + $0x60] sm:$0xff]
        %v349 = vld [vmem:[%s313 + $0x68] sm:$0x1]
        %v350 = vld [vmem:[%s313 + $0x70] sm:$0xff]
        %v351 = vld [vmem:[%s313 + $0x78] sm:$0x1]
        %v352 = vld [vmem:[%s313 + $0x80] sm:$0xff]
        %v353 = vld [vmem:[%s313 + $0x88] sm:$0x1]
        %v354 = vld [vmem:[%s313 + $0x90] sm:$0xff]
        %v355 = vld [vmem:[%s313 + $0x98] sm:$0x1]
        %v356 = vld [vmem:[%s313 + $0xa0] sm:$0xff]
        %v357 = vld [vmem:[%s313 + $0xa8] sm:$0x1]
        %v358 = vld [vmem:[%s313 + $0xb0] sm:$0xff]
        %v359 = vld [vmem:[%s313 + $0xb8] sm:$0x1]
        %v360 = vld [vmem:[%s313 + $0xc0] sm:$0xff]
        %v361 = vld [vmem:[%s313 + $0xc8] sm:$0x1]
        %v362 = vld [vmem:[%s313 + $0xd0] sm:$0xff]
        %v363 = vld [vmem:[%s313 + $0xd8] sm:$0x1]
        %v364 = vld [vmem:[%s313 + $0xe0] sm:$0xff]
        %v365 = vld [vmem:[%s313 + $0xe8] sm:$0x1]
        %v366 = vld [vmem:[%s313 + $0xf0] sm:$0xff]
        %v367 = vld [vmem:[%s313 + $0xf8] sm:$0x1]
        %v368 = vld [vmem:[%s331] sm:$0xff]
        %v369 = vld [vmem:[%s331 + $0x8] sm:$0x1]
        %vm386 = vcmask 1046528
        %v387 = vrot.slane %v336, 1
        %v388 = vrot.slane %v337, 1
        %v389 = vsel %vm386, %v387, %v388
        %v390 = vrot.slane %v340, 1
        %v391 = vrot.slane %v341, 1
        %v392 = vsel %vm386, %v390, %v391
        %v393 = vrot.slane %v344, 1
        %v394 = vrot.slane %v345, 1
        %v395 = vsel %vm386, %v393, %v394
        %v396 = vrot.slane %v348, 1
        %v397 = vrot.slane %v349, 1
        %v398 = vsel %vm386, %v396, %v397
        %v399 = vrot.slane %v352, 1
        %v400 = vrot.slane %v353, 1
        %v401 = vsel %vm386, %v399, %v400
        %v402 = vrot.slane %v356, 1
        %v403 = vrot.slane %v357, 1
        %v404 = vsel %vm386, %v402, %v403
        %v405 = vrot.slane %v360, 1
        %v406 = vrot.slane %v361, 1
        %v407 = vsel %vm386, %v405, %v406
        %v408 = vrot.slane %v364, 1
        %v409 = vrot.slane %v365, 1
        %v410 = vsel %vm386, %v408, %v409
        %411 = vrot.lane.b32.xlu0 %v389, 8
        %v412 = vpop.permute.xlu0 %411
        %413 = vrot.lane.b32.xlu0 %v392, 8
        %v414 = vpop.permute.xlu0 %413
        %415 = vrot.lane.b32.xlu0 %v395, 8
        %v416 = vpop.permute.xlu0 %415
        %417 = vrot.lane.b32.xlu0 %v398, 8
        %v418 = vpop.permute.xlu0 %417
        %419 = vrot.lane.b32.xlu0 %v401, 8
        %v420 = vpop.permute.xlu0 %419
        %421 = vrot.lane.b32.xlu0 %v404, 8
        %v422 = vpop.permute.xlu0 %421
        %423 = vrot.lane.b32.xlu0 %v407, 8
        %v424 = vpop.permute.xlu0 %423
        %425 = vrot.lane.b32.xlu0 %v410, 8
        %v426 = vpop.permute.xlu0 %425
        %443 = vrot.lane.b32.xlu0 %v338, 12
        %v444 = vpop.permute.xlu0 %443
        %445 = vrot.lane.b32.xlu0 %v342, 12
        %v446 = vpop.permute.xlu0 %445
        %447 = vrot.lane.b32.xlu0 %v346, 12
        %v448 = vpop.permute.xlu0 %447
        %449 = vrot.lane.b32.xlu0 %v350, 12
        %v450 = vpop.permute.xlu0 %449
        %451 = vrot.lane.b32.xlu0 %v354, 12
        %v452 = vpop.permute.xlu0 %451
        %453 = vrot.lane.b32.xlu0 %v358, 12
        %v454 = vpop.permute.xlu0 %453
        %455 = vrot.lane.b32.xlu0 %v362, 12
        %v456 = vpop.permute.xlu0 %455
        %457 = vrot.lane.b32.xlu0 %v366, 12
        %v458 = vpop.permute.xlu0 %457
        %v475 = vrot.slane %v338, 1
        %v476 = vrot.slane %v339, 1
        %v477 = vsel %vm386, %v475, %v476
        %v478 = vrot.slane %v342, 1
        %v479 = vrot.slane %v343, 1
        %v480 = vsel %vm386, %v478, %v479
        %v481 = vrot.slane %v346, 1
        %v482 = vrot.slane %v347, 1
        %v483 = vsel %vm386, %v481, %v482
        %v484 = vrot.slane %v350, 1
        %v485 = vrot.slane %v351, 1
        %v486 = vsel %vm386, %v484, %v485
        %v487 = vrot.slane %v354, 1
        %v488 = vrot.slane %v355, 1
        %v489 = vsel %vm386, %v487, %v488
        %v490 = vrot.slane %v358, 1
        %v491 = vrot.slane %v359, 1
        %v492 = vsel %vm386, %v490, %v491
        %v493 = vrot.slane %v362, 1
        %v494 = vrot.slane %v363, 1
        %v495 = vsel %vm386, %v493, %v494
        %v496 = vrot.slane %v366, 1
        %v497 = vrot.slane %v367, 1
        %v498 = vsel %vm386, %v496, %v497
        %499 = vrot.lane.b32.xlu0 %v477, 20
        %v500 = vpop.permute.xlu0 %499
        %501 = vrot.lane.b32.xlu0 %v480, 20
        %v502 = vpop.permute.xlu0 %501
        %503 = vrot.lane.b32.xlu0 %v483, 20
        %v504 = vpop.permute.xlu0 %503
        %505 = vrot.lane.b32.xlu0 %v486, 20
        %v506 = vpop.permute.xlu0 %505
        %507 = vrot.lane.b32.xlu0 %v489, 20
        %v508 = vpop.permute.xlu0 %507
        %509 = vrot.lane.b32.xlu0 %v492, 20
        %v510 = vpop.permute.xlu0 %509
        %511 = vrot.lane.b32.xlu0 %v495, 20
        %v512 = vpop.permute.xlu0 %511
        %513 = vrot.lane.b32.xlu0 %v498, 20
        %v514 = vpop.permute.xlu0 %513
        %524 = vrot.lane.b32.xlu0 %v340, 24
        %v525 = vpop.permute.xlu0 %524
        %526 = vrot.lane.b32.xlu0 %v344, 24
        %v527 = vpop.permute.xlu0 %526
        %528 = vrot.lane.b32.xlu0 %v348, 24
        %v529 = vpop.permute.xlu0 %528
        %530 = vrot.lane.b32.xlu0 %v352, 24
        %v531 = vpop.permute.xlu0 %530
        %532 = vrot.lane.b32.xlu0 %v356, 24
        %v533 = vpop.permute.xlu0 %532
        %534 = vrot.lane.b32.xlu0 %v360, 24
        %v535 = vpop.permute.xlu0 %534
        %536 = vrot.lane.b32.xlu0 %v364, 24
        %v537 = vpop.permute.xlu0 %536
        %538 = vrot.lane.b32.xlu0 %v368, 24
        %v539 = vpop.permute.xlu0 %538
        %v549 = vrot.slane %v368, 1
        %v550 = vrot.slane %v369, 1
        %v551 = vsel %vm386, %v549, %v550
        %552 = vrot.lane.b32.xlu0 %v392, 32
        %v553 = vpop.permute.xlu0 %552
        %554 = vrot.lane.b32.xlu0 %v395, 32
        %v555 = vpop.permute.xlu0 %554
        %556 = vrot.lane.b32.xlu0 %v398, 32
        %v557 = vpop.permute.xlu0 %556
        %558 = vrot.lane.b32.xlu0 %v401, 32
        %v559 = vpop.permute.xlu0 %558
        %560 = vrot.lane.b32.xlu0 %v404, 32
        %v561 = vpop.permute.xlu0 %560
        %562 = vrot.lane.b32.xlu0 %v407, 32
        %v563 = vpop.permute.xlu0 %562
        %564 = vrot.lane.b32.xlu0 %v410, 32
        %v565 = vpop.permute.xlu0 %564
        %566 = vrot.lane.b32.xlu0 %v551, 32
        %v567 = vpop.permute.xlu0 %566
        %vm576 = vcmask 64512
        %v577 = vsel %vm576, %v336, %v412
        %v578 = vsel %vm576, %v340, %v414
        %v579 = vsel %vm576, %v344, %v416
        %v580 = vsel %vm576, %v348, %v418
        %v581 = vsel %vm576, %v352, %v420
        %v582 = vsel %vm576, %v356, %v422
        %v583 = vsel %vm576, %v360, %v424
        %v584 = vsel %vm576, %v364, %v426
        %vm585 = vcmask 97280
        %v586 = vsel %vm585, %v577, %v444
        %v587 = vsel %vm585, %v578, %v446
        %v588 = vsel %vm585, %v579, %v448
        %v589 = vsel %vm585, %v580, %v450
        %v590 = vsel %vm585, %v581, %v452
        %v591 = vsel %vm585, %v582, %v454
        %v592 = vsel %vm585, %v583, %v456
        %v593 = vsel %vm585, %v584, %v458
        %vm594 = vcmask 130048
        %v595 = vsel %vm594, %v586, %v444
        %v596 = vsel %vm594, %v587, %v446
        %v597 = vsel %vm594, %v588, %v448
        %v598 = vsel %vm594, %v589, %v450
        %v599 = vsel %vm594, %v590, %v452
        %v600 = vsel %vm594, %v591, %v454
        %v601 = vsel %vm594, %v592, %v456
        %v602 = vsel %vm594, %v593, %v458
        %vm603 = vcmask 162816
        %v604 = vsel %vm603, %v595, %v500
        %v605 = vsel %vm603, %v596, %v502
        %v606 = vsel %vm603, %v597, %v504
        %v607 = vsel %vm603, %v598, %v506
        %v608 = vsel %vm603, %v599, %v508
        %v609 = vsel %vm603, %v600, %v510
        %v610 = vsel %vm603, %v601, %v512
        %v611 = vsel %vm603, %v602, %v514
        %vm612 = vcmask 195584
        %v613 = vsel %vm612, %v604, %v525
        %v614 = vsel %vm612, %v605, %v527
        %v615 = vsel %vm612, %v606, %v529
        %v616 = vsel %vm612, %v607, %v531
        %v617 = vsel %vm612, %v608, %v533
        %v618 = vsel %vm612, %v609, %v535
        %v619 = vsel %vm612, %v610, %v537
        %v620 = vsel %vm612, %v611, %v539
        %vm621 = vcmask 228352
        %v622 = vsel %vm621, %v613, %v525
        %v623 = vsel %vm621, %v614, %v527
        %v624 = vsel %vm621, %v615, %v529
        %v625 = vsel %vm621, %v616, %v531
        %v626 = vsel %vm621, %v617, %v533
        %v627 = vsel %vm621, %v618, %v535
        %v628 = vsel %vm621, %v619, %v537
        %v629 = vsel %vm621, %v620, %v539
        %vm630 = vcmask 261120
        %v631 = vsel %vm630, %v622, %v553
        %v632 = vsel %vm630, %v623, %v555
        %v633 = vsel %vm630, %v624, %v557
        %v634 = vsel %vm630, %v625, %v559
        %v635 = vsel %vm630, %v626, %v561
        %v636 = vsel %vm630, %v627, %v563
        %v637 = vsel %vm630, %v628, %v565
        %v638 = vsel %vm630, %v629, %v567
        %v639 = vld [vmem:[%s2] sm:$0xff]
        %v640 = vld [vmem:[%s2 + $0x8] sm:$0xff]
        %v641 = vld [vmem:[%s2 + $0x10] sm:$0xff]
        %v642 = vld [vmem:[%s2 + $0x18] sm:$0xff]
        %v643 = vld [vmem:[%s2 + $0x20] sm:$0xf]
        %vm644 = vcmask 293888
        %v646 = vsel %vm644, %v631, 0
        %v649 = vsel %vm644, %v632, 0
        %v652 = vsel %vm644, %v633, 0
        %v655 = vsel %vm644, %v634, 0
        %v658 = vsel %vm644, %v635, 0
        %v661 = vsel %vm644, %v636, 0
        %v664 = vsel %vm644, %v637, 0
        %v667 = vsel %vm644, %v638, 0
        %vm669 = vcmask 1043456
        %v671 = vsel %vm669, %v643, 0
        %673 = vmatprep.subr.mxu0 0.0
        %674 = vmatpush1.msra.mxu0 %v639
        %675 = vmatprep.subr.mxu0 0.0
        %676 = vmatpush1.msra.mxu0 %v640
        %677 = vmatprep.subr.mxu0 0.0
        %678 = vmatpush1.msra.mxu0 %v641
        %679 = vmatprep.subr.mxu0 0.0
        %680 = vmatpush1.msra.mxu0 %v642
        %681 = vmatprep.subr.mxu0 0.0
        %682 = vmatpush1.msra.mxu0 %v671
        %683 = vmatprep.subr.mxu0 0.0
        %684 = vmatpush1.msra.mxu0 0.0
        %685 = vmatprep.subr.mxu0 0.0
        %686 = vmatpush1.msra.mxu0 0.0
        %687 = vmatprep.subr.mxu0 0.0
        %688 = vmatpush1.msra.mxu0 0.0
        %689 = vmatprep.subr.mxu0 0.0
        %690 = vmatpush1.msra.mxu0 0.0
        %691 = vmatprep.subr.mxu0 0.0
        %692 = vmatpush1.msra.mxu0 0.0
        %693 = vmatprep.subr.mxu0 0.0
        %694 = vmatpush1.msra.mxu0 0.0
        %695 = vmatprep.subr.mxu0 0.0
        %696 = vmatpush1.msra.mxu0 0.0
        %697 = vmatprep.subr.mxu0 0.0
        %698 = vmatpush1.msra.mxu0 0.0
        %699 = vmatprep.subr.mxu0 0.0
        %700 = vmatpush1.msra.mxu0 0.0
        %701 = vmatprep.subr.mxu0 0.0
        %702 = vmatpush1.msra.mxu0 0.0
        %703 = vmatprep.subr.mxu0 0.0
        %704 = vmatpush1.msra.mxu0 0.0
        %705 = vmatprep.subr.mxu0 0.0
        %706 = vmatpush1.msra.mxu0 0.0
        %707 = vmatprep.subr.mxu0 0.0
        %708 = vmatpush1.msra.mxu0 0.0
        %709 = vmatprep.subr.mxu0 0.0
        %710 = vmatpush1.msra.mxu0 0.0
        %711 = vmatprep.subr.mxu0 0.0
        %712 = vmatpush1.msra.mxu0 0.0
        %713 = vmatprep.subr.mxu0 0.0
        %714 = vmatpush1.msra.mxu0 0.0
        %715 = vmatprep.subr.mxu0 0.0
        %716 = vmatpush1.msra.mxu0 0.0
        %717 = vmatprep.subr.mxu0 0.0
        %718 = vmatpush1.msra.mxu0 0.0
        %719 = vmatprep.subr.mxu0 0.0
        %720 = vmatpush1.msra.mxu0 0.0
        %721 = vmatprep.subr.mxu0 0.0
        %722 = vmatpush1.msra.mxu0 0.0
        %723 = vmatprep.subr.mxu0 0.0
        %724 = vmatpush1.msra.mxu0 0.0
        %725 = vmatprep.subr.mxu0 0.0
        %726 = vmatpush1.msra.mxu0 0.0
        %727 = vmatprep.subr.mxu0 0.0
        %728 = vmatpush1.msra.mxu0 0.0
        %729 = vmatprep.subr.mxu0 0.0
        %730 = vmatpush1.msra.mxu0 0.0
        %731 = vmatprep.subr.mxu0 0.0
        %732 = vmatpush1.msra.mxu0 0.0
        %733 = vmatprep.subr.mxu0 0.0
        %734 = vmatpush1.msra.mxu0 0.0
        %735 = vmatprep.subr.mxu0 0.0
        %736 = vmatpush1.msra.mxu0 0.0
        %737 = vmatprep.mubr.f32.mxu0 0.0
        %738 = vmatmul.mubr.f32.gmra.mrb[0].mxu0 %v646
        %v739 = vpop.f32.mrb[0].mxu0
        %v740 = vadd.f32 0.0, %v739
        %v741 = vpop.f32.mrb[0].mxu0
        %742 = vmatprep.mubr.f32.mxu0 0.0
        %743 = vmatmul.mubr.f32.gmra.mrb[0].mxu0 %v649
        %v744 = vpop.f32.mrb[0].mxu0
        %v745 = vadd.f32 0.0, %v744
        %v746 = vpop.f32.mrb[0].mxu0
        %747 = vmatprep.mubr.f32.mxu0 0.0
        %748 = vmatmul.mubr.f32.gmra.mrb[0].mxu0 %v652
        %v749 = vpop.f32.mrb[0].mxu0
        %v750 = vadd.f32 0.0, %v749
        %v751 = vpop.f32.mrb[0].mxu0
        %752 = vmatprep.mubr.f32.mxu0 0.0
        %753 = vmatmul.mubr.f32.gmra.mrb[0].mxu0 %v655
        %v754 = vpop.f32.mrb[0].mxu0
        %v755 = vadd.f32 0.0, %v754
        %v756 = vpop.f32.mrb[0].mxu0
        %757 = vmatprep.mubr.f32.mxu0 0.0
        %758 = vmatmul.mubr.f32.gmra.mrb[0].mxu0 %v658
        %v759 = vpop.f32.mrb[0].mxu0
        %v760 = vadd.f32 0.0, %v759
        %v761 = vpop.f32.mrb[0].mxu0
        %762 = vmatprep.mubr.f32.mxu0 0.0
        %763 = vmatmul.mubr.f32.gmra.mrb[0].mxu0 %v661
        %v764 = vpop.f32.mrb[0].mxu0
        %v765 = vadd.f32 0.0, %v764
        %v766 = vpop.f32.mrb[0].mxu0
        %767 = vmatprep.mubr.f32.mxu0 0.0
        %768 = vmatmul.mubr.f32.gmra.mrb[0].mxu0 %v664
        %v769 = vpop.f32.mrb[0].mxu0
        %v770 = vadd.f32 0.0, %v769
        %v771 = vpop.f32.mrb[0].mxu0
        %772 = vmatprep.mubr.f32.mxu0 0.0
        %773 = vmatmul.mubr.f32.gmra.mrb[0].mxu0 %v667
        %v774 = vpop.f32.mrb[0].mxu0
        %v775 = vadd.f32 0.0, %v774
        %v776 = vpop.f32.mrb[0].mxu0
        %777 = vdwg.mxu0
        %778 = vrot.lane.b32.xlu0 %v477, 4
        %v779 = vpop.permute.xlu0 %778
        %780 = vrot.lane.b32.xlu0 %v480, 4
        %v781 = vpop.permute.xlu0 %780
        %782 = vrot.lane.b32.xlu0 %v483, 4
        %v783 = vpop.permute.xlu0 %782
        %784 = vrot.lane.b32.xlu0 %v486, 4
        %v785 = vpop.permute.xlu0 %784
        %786 = vrot.lane.b32.xlu0 %v489, 4
        %v787 = vpop.permute.xlu0 %786
        %788 = vrot.lane.b32.xlu0 %v492, 4
        %v789 = vpop.permute.xlu0 %788
        %790 = vrot.lane.b32.xlu0 %v495, 4
        %v791 = vpop.permute.xlu0 %790
        %792 = vrot.lane.b32.xlu0 %v498, 4
        %v793 = vpop.permute.xlu0 %792
        %v802 = vmax.f32 %v338, %v779
        %v803 = vmax.f32 %v342, %v781
        %v804 = vmax.f32 %v346, %v783
        %v805 = vmax.f32 %v350, %v785
        %v806 = vmax.f32 %v354, %v787
        %v807 = vmax.f32 %v358, %v789
        %v808 = vmax.f32 %v362, %v791
        %v809 = vmax.f32 %v366, %v793
        %810 = vrot.lane.b32.xlu0 %v392, 4
        %v811 = vpop.permute.xlu0 %810
        %812 = vrot.lane.b32.xlu0 %v395, 4
        %v813 = vpop.permute.xlu0 %812
        %814 = vrot.lane.b32.xlu0 %v398, 4
        %v815 = vpop.permute.xlu0 %814
        %816 = vrot.lane.b32.xlu0 %v401, 4
        %v817 = vpop.permute.xlu0 %816
        %818 = vrot.lane.b32.xlu0 %v404, 4
        %v819 = vpop.permute.xlu0 %818
        %820 = vrot.lane.b32.xlu0 %v407, 4
        %v821 = vpop.permute.xlu0 %820
        %822 = vrot.lane.b32.xlu0 %v410, 4
        %v823 = vpop.permute.xlu0 %822
        %824 = vrot.lane.b32.xlu0 %v551, 4
        %v825 = vpop.permute.xlu0 %824
        %v834 = vmax.f32 %v340, %v811
        %v835 = vmax.f32 %v344, %v813
        %v836 = vmax.f32 %v348, %v815
        %v837 = vmax.f32 %v352, %v817
        %v838 = vmax.f32 %v356, %v819
        %v839 = vmax.f32 %v360, %v821
        %v840 = vmax.f32 %v364, %v823
        %v841 = vmax.f32 %v368, %v825
        %v842 = vmax.f32 %v802, %v834
        %v843 = vmax.f32 %v803, %v835
        %v844 = vmax.f32 %v804, %v836
        %v845 = vmax.f32 %v805, %v837
        %v846 = vmax.f32 %v806, %v838
        %v847 = vmax.f32 %v807, %v839
        %v848 = vmax.f32 %v808, %v840
        %v849 = vmax.f32 %v809, %v841
        %858 = vrot.lane.b32.xlu0 %v842, 8
        %v859 = vpop.permute.xlu0 %858
        %860 = vrot.lane.b32.xlu0 %v843, 8
        %v861 = vpop.permute.xlu0 %860
        %862 = vrot.lane.b32.xlu0 %v844, 8
        %v863 = vpop.permute.xlu0 %862
        %864 = vrot.lane.b32.xlu0 %v845, 8
        %v865 = vpop.permute.xlu0 %864
        %866 = vrot.lane.b32.xlu0 %v846, 8
        %v867 = vpop.permute.xlu0 %866
        %868 = vrot.lane.b32.xlu0 %v847, 8
        %v869 = vpop.permute.xlu0 %868
        %870 = vrot.lane.b32.xlu0 %v848, 8
        %v871 = vpop.permute.xlu0 %870
        %872 = vrot.lane.b32.xlu0 %v849, 8
        %v873 = vpop.permute.xlu0 %872
        %v882 = vsel %vm585, %v740, %v859
        %v883 = vsel %vm585, %v745, %v861
        %v884 = vsel %vm585, %v750, %v863
        %v885 = vsel %vm585, %v755, %v865
        %v886 = vsel %vm585, %v760, %v867
        %v887 = vsel %vm585, %v765, %v869
        %v888 = vsel %vm585, %v770, %v871
        %v889 = vsel %vm585, %v775, %v873
        %v890 = vld [vmem:[%s3] sm:$0x1]
        %v892 = vlaneseq
        %v893 = vshrl.u32 %v892, 7
        %v894 = vsub.s32 0, %v893
        %v895 = vrot.slane %v890, %v894
        %v897 = vmul.f32 %v882, %v895
        %v898 = vmul.f32 %v883, %v895
        %v899 = vmul.f32 %v884, %v895
        %v900 = vmul.f32 %v885, %v895
        %v901 = vmul.f32 %v886, %v895
        %v902 = vmul.f32 %v887, %v895
        %v903 = vmul.f32 %v888, %v895
        %v904 = vmul.f32 %v889, %v895
        %v905 = vld [vmem:[%s4] sm:$0x1]
        %v907 = vlaneseq
        %v908 = vshrl.u32 %v907, 7
        %v909 = vsub.s32 0, %v908
        %v910 = vrot.slane %v905, %v909
        %v912 = vadd.f32 %v897, %v910
        %v913 = vadd.f32 %v898, %v910
        %v914 = vadd.f32 %v899, %v910
        %v915 = vadd.f32 %v900, %v910
        %v916 = vadd.f32 %v901, %v910
        %v917 = vadd.f32 %v902, %v910
        %v918 = vadd.f32 %v903, %v910
        %v919 = vadd.f32 %v904, %v910
        %v920 = vmax.f32 %v912, 0.0
        %v921 = vmax.f32 %v913, 0.0
        %v922 = vmax.f32 %v914, 0.0
        %v923 = vmax.f32 %v915, 0.0
        %v924 = vmax.f32 %v916, 0.0
        %v925 = vmax.f32 %v917, 0.0
        %v926 = vmax.f32 %v918, 0.0
        %v927 = vmax.f32 %v919, 0.0
        %928 = vst.msk [vmem:[%s297] sm:$0xff] %vm594, %v920
        %929 = vst.msk [vmem:[%s297 + $0x8] sm:$0xff] %vm594, %v921
        %930 = vst.msk [vmem:[%s297 + $0x10] sm:$0xff] %vm594, %v922
        %931 = vst.msk [vmem:[%s297 + $0x18] sm:$0xff] %vm594, %v923
        %932 = vst.msk [vmem:[%s297 + $0x20] sm:$0xff] %vm594, %v924
        %933 = vst.msk [vmem:[%s297 + $0x28] sm:$0xff] %vm594, %v925
        %934 = vst.msk [vmem:[%s297 + $0x30] sm:$0xff] %vm594, %v926
        %935 = vst.msk [vmem:[%s297 + $0x38] sm:$0xff] %vm594, %v927
        %s936 = sand.u32 %s164, 1
        %s937 = scalar_lea.sflag [#allocation3], %s936
        %s938 = sand.u32 %s164, 1
        %s939 = smul.addr %s938, 64
        %s940 = scalar_lea.vmem [#allocation2], %s939
        // Predicated region
        $region41: #{downsampler_block.3} parent=39 // pred_check
          %p941 = pneg %p174
        $region42: #{downsampler_block.3} parent=39 // pred_check_branch
          %943 = sbr.rel (%p941) target = $region44
        $region43: #{downsampler_block.3} parent=39 // pred_region
          %s944 = sadd.s32 %s23, %s24
          %s945 = smul.u32 8, %s944
          %s947 = ssub.s32 1024, 1024
          %948 = vsyncadd %s937, %s947
          %s949 = smul.addr %s945, 128
          %s950 = scalar_lea.hbm %s5, %s949
          %s951 = sshll.u32 %s940, 4
          %s952 = int_to_ptr.vmem [resolvable:$true] %s951
          %957 = dma.vmem_to_hbm [thread:$0]  %s952, 1024, %s950, %s937, 128, 128, 8
        $region44: #{downsampler_block.3} parent=39 // pred_fallthru
          _
      $region40: #{downsampler_block.3} parent=5 // pred_fallthru
        _
      %p958 = scmp.le.s32.totalorder 2, %s14
      // Predicated region
      $region45: #{downsampler_block.3} parent=5 // pred_check
        %p959 = pneg %p958
      $region46: #{downsampler_block.3} parent=5 // pred_check_branch
        %961 = sbr.rel (%p959) target = $region48
      $region47: #{downsampler_block.3} parent=5 // pred_region
        %s962 = ssub.s32 %s14, 2
        // Predicated region
        $region49: #{downsampler_block.3} parent=47 // pred_check
          %p963 = pneg %p180
        $region50: #{downsampler_block.3} parent=47 // pred_check_branch
          %965 = sbr.rel (%p963) target = $region52
        $region51: #{downsampler_block.3} parent=47 // pred_region
          %s966 = sand.u32 %s165, 1
          %s967 = scalar_lea.sflag [#allocation3], %s966
          %s968 = sand.u32 %s165, 1
          %s969 = smul.addr %s968, 64
          %s970 = scalar_lea.vmem [#allocation2], %s969
          %971 = dma.done %s967, 1024
        $region52: #{downsampler_block.3} parent=47 // pred_fallthru
          _
      $region48: #{downsampler_block.3} parent=5 // pred_fallthru
        _
    $region6: #{downsampler_block.3} parent=1 // loop_footer
      %s18 = sadd.s32 1, %s14
    $region7: #{downsampler_block.3} parent=1 // loop_footer_branch
      %13 = sbr.rel target = $region3
    $region8: #{downsampler_block.3} parent=1 // loop_exit
      _
    %972 = vsyncpa [#allocation3], 1
    %s973 = scalar_lea.sflag [#allocation3], 1
    %974 = vsyncpa %s973, 1

</llo_original>
